<compile_context>
chip_gen: v6e
topology: v6e:2x2x1
jax: 0.10.0
libtpu: 0.0.40
codegen_flags: <defaults>
</compile_context>

<pallas_src>
import functools

import jax
import jax.numpy as jnp
from jax import lax
from jax.experimental import pallas as pl
from jax.experimental.pallas import tpu as pltpu

# ---------------- synthetic Granite-style config (small) ----------------
HIDDEN = 64
NUM_HEADS = 4
NUM_KV_HEADS = 2
HEAD_DIM = HIDDEN // NUM_HEADS          # 16
KV_GROUPS = NUM_HEADS // NUM_KV_HEADS   # 2
ATTN_MULTIPLIER = 0.125                 # config.attention_multiplier
INIT_RANGE = 0.02                       # config.initializer_range
ROPE_THETA = 10000.0
DTYPE = jnp.float32

Q_DIM = NUM_HEADS * HEAD_DIM            # 64
KV_DIM = NUM_KV_HEADS * HEAD_DIM        # 32
QKV_DIM = Q_DIM + 2 * KV_DIM            # 128 (lane-dense projection output)


# ---------------- fused forward kernel (one grid point per batch) ----------------
def _granite_attn_kernel(x_ref, wqkv_ref, wo_ref, cos_ref, sina_ref, sinb_ref,
                         out_ref, *w_refs, num_heads, num_kv_heads, head_dim,
                         seq_len, pack, compute_dtype, output_attentions):
    groups = num_heads // num_kv_heads
    q_dim = num_heads * head_dim
    kv_dim = num_kv_heads * head_dim
    qkv_dim = q_dim + 2 * kv_dim
    half = head_dim // 2

    x = x_ref[0]                                                  # (S, H)

    # --- fused QKV projection: one lane-dense 128-wide MXU pass (bf16 ops) ---
    qkv = jnp.dot(x.astype(compute_dtype), wqkv_ref[...],
                  preferred_element_type=jnp.float32)             # (S, 128) f32

    # --- RoPE on the whole packed [q|k|v] block in one f32 VPU pass ----------
    # rotate_half == two full-block lane rolls (XLU, off the VPU slot) gated by
    # pre-tiled cos / (-sin,0) / (0,+sin) tables; v columns have cos=1, sin=0
    # so they pass through exactly.  Wrap-around columns always hit sin==0.
    roped = (qkv * cos_ref[...]
             + pltpu.roll(qkv, qkv_dim - half, axis=1) * sina_ref[...]
             + pltpu.roll(qkv, half, axis=1) * sinb_ref[...])     # (S, 128) f32

    # --- causal mask generated in-kernel (no HBM mask input), f32 ------------
    row = lax.broadcasted_iota(jnp.int32, (seq_len, seq_len), 0)
    col = lax.broadcasted_iota(jnp.int32, (seq_len, seq_len), 1)
    neg = jnp.where(col <= row, 0.0, -1e9).astype(jnp.float32)    # (S, S)
    neg = jnp.concatenate([neg] * groups, axis=0)                 # (g*S, S)

    acc = jnp.zeros((seq_len, x_ref.shape[2]), jnp.float32)       # (S, H)

    for j in range(num_kv_heads):          # tiny & static -> unrolled
        base = j * groups * head_dim
        # Stack the `groups` query heads sharing kv head j -> one MXU issue
        # with M = groups*S instead of `groups` separate (S, D) matmuls.
        q_stack = jnp.concatenate(
            [roped[:, base + g * head_dim: base + (g + 1) * head_dim]
             for g in range(groups)], axis=0).astype(compute_dtype)   # (g*S, D)
        k_j = roped[:, q_dim + j * head_dim:
                    q_dim + (j + 1) * head_dim].astype(compute_dtype)  # (S, D)
        v_j = roped[:, q_dim + kv_dim + j * head_dim:
                    q_dim + kv_dim + (j + 1) * head_dim].astype(compute_dtype)

        # q.k^T without materializing k^T (contract dim 1 of both operands).
        s = lax.dot_general(q_stack, k_j, (((1,), (1,)), ((), ())),
                            preferred_element_type=jnp.float32)    # (g*S, S) f32
        s = s + neg                                                # f32 mask add
        m = jnp.max(s, axis=-1, keepdims=True)
        p = jnp.exp(s - m)
        l = jnp.sum(p, axis=-1, keepdims=True)

        if output_attentions:
            # Debug path: exact normalized weights are materialized & stored.
            p = p * pl.reciprocal(l, approx=False)
            w_refs[0][0, j] = p.astype(jnp.float32)                # (g*S, S)
            ctx = jnp.dot(p.astype(compute_dtype), v_j,
                          preferred_element_type=jnp.float32)      # (g*S, D)
        else:
            # Production path: fold 1/l into the context (EUP approx recip).
            ctx = jnp.dot(p.astype(compute_dtype), v_j,
                          preferred_element_type=jnp.float32)
            ctx = ctx * pl.reciprocal(l, approx=True)

        # Un-stack the group along lanes and fold o_proj per KV group:
        #   out += [ctx_h0 | ctx_h1] @ wo[rows of heads h0,h1]
        ctx_pair = jnp.concatenate([ctx[g * seq_len:(g + 1) * seq_len]
                                    for g in range(groups)], axis=1)  # (S, g*D)
        wo_grp = wo_ref[pl.ds(base, groups * head_dim), :]             # (g*D, H)
        acc = acc + jnp.dot(ctx_pair.astype(compute_dtype), wo_grp,
                            preferred_element_type=jnp.float32)

    # --- lane-dense output slab: (S, H) -> (S/pack, pack*H == 128) -----------
    if pack > 1:
        rows = seq_len // pack
        out_blk = jnp.concatenate([acc[i * rows:(i + 1) * rows]
                                   for i in range(pack)], axis=1)
    else:
        out_blk = acc
    out_ref[0] = out_blk.astype(out_ref.dtype)


# ---------------- RoPE tables for the single-pass packed rotation ----------------
def _build_rope_tables(cos, sin):
    """(S, D) cos/sin -> three (S, QKV_DIM) tables so RoPE of the packed
    [q | k | v] projection is a single fused pass:
        roped = qkv*cos_t + roll(qkv, -D/2)*sin_a + roll(qkv, +D/2)*sin_b
    q/k columns carry tiled cos / (-sin on low half, 0) / (0, +sin on high
    half); v columns carry (1, 0, 0) so they pass through unchanged."""
    S, D = cos.shape
    half = D // 2
    lo = jnp.arange(D) < half
    sin_a1 = jnp.where(lo, -sin, 0.0)        # multiplies roll(x, -half)
    sin_b1 = jnp.where(lo, 0.0, sin)         # multiplies roll(x, +half)

    def tile(t, n):
        return jnp.tile(t, (1, n))

    ones_v = jnp.ones((S, KV_DIM), cos.dtype)
    zero_v = jnp.zeros((S, KV_DIM), cos.dtype)
    cos_t = jnp.concatenate([tile(cos, NUM_HEADS), tile(cos, NUM_KV_HEADS), ones_v], axis=1)
    sin_a = jnp.concatenate([tile(sin_a1, NUM_HEADS), tile(sin_a1, NUM_KV_HEADS), zero_v], axis=1)
    sin_b = jnp.concatenate([tile(sin_b1, NUM_HEADS), tile(sin_b1, NUM_KV_HEADS), zero_v], axis=1)
    return cos_t, sin_a, sin_b


# ---------------- wrapper ----------------
def granite_attention_forward(hidden_states, cos, sin, params, *,
                              compute_dtype=jnp.bfloat16,
                              output_attentions=False):
    """hidden_states: (B, S, HIDDEN); cos/sin: (S, HEAD_DIM) batch-shared rotary."""
    B, S, H = hidden_states.shape

    # Fold attention_multiplier into wq (RoPE is linear; 0.125 is exact), fuse
    # the three projections into one lane-dense [H, 128] weight, pre-cast the
    # MXU weights to compute_dtype (halves weight DMA + VMEM in bf16).
    wqkv = jnp.concatenate([params["wq"] * ATTN_MULTIPLIER,
                            params["wk"], params["wv"]],
                           axis=1).astype(compute_dtype)
    wo = params["wo"].astype(compute_dtype)
    cos_t, sin_a, sin_b = _build_rope_tables(cos.astype(jnp.float32),
                                             sin.astype(jnp.float32))

    # Lane-dense output slab (H=64 < 128 at this toy size); at real H>=128 the
    # natural (B, S, H) layout is already lane-dense and pack degenerates to 1.
    pack = 128 // H if (H < 128 and 128 % H == 0 and S % (128 // H) == 0) else 1
    rows = S // pack

    kernel = functools.partial(
        _granite_attn_kernel,
        num_heads=NUM_HEADS, num_kv_heads=NUM_KV_HEADS, head_dim=HEAD_DIM,
        seq_len=S, pack=pack, compute_dtype=compute_dtype,
        output_attentions=output_attentions)

    out_shape = [jax.ShapeDtypeStruct((B, rows, pack * H), hidden_states.dtype)]
    out_specs = [pl.BlockSpec((1, rows, pack * H), lambda b: (b, 0, 0))]
    if output_attentions:
        out_shape.append(jax.ShapeDtypeStruct(
            (B, NUM_KV_HEADS, KV_GROUPS * S, S), jnp.float32))
        out_specs.append(pl.BlockSpec(
            (1, NUM_KV_HEADS, KV_GROUPS * S, S), lambda b: (b, 0, 0, 0)))

    itemsize = 2 if compute_dtype == jnp.bfloat16 else 4
    flops = (2 * B * S * H * QKV_DIM            # qkv projection
             + 4 * B * NUM_HEADS * S * S * HEAD_DIM   # scores + p@v
             + 2 * B * S * Q_DIM * H)           # o_proj
    bytes_accessed = (B * S * H * 4                       # x
                      + (H * QKV_DIM + Q_DIM * H) * itemsize   # weights
                      + 3 * S * QKV_DIM * 4               # rope tables
                      + B * S * H * 4                     # output
                      + (B * NUM_HEADS * S * S * 4 if output_attentions else 0))
    cost = pl.CostEstimate(flops=flops,
                           transcendentals=B * NUM_HEADS * S * S,
                           bytes_accessed=bytes_accessed)

    results = pl.pallas_call(
        kernel,
        out_shape=tuple(out_shape),
        grid=(B,),
        in_specs=[
            pl.BlockSpec((1, S, H), lambda b: (b, 0, 0)),      # hidden_states[b]
            pl.BlockSpec((H, QKV_DIM), lambda b: (0, 0)),      # fused wqkv
            pl.BlockSpec((Q_DIM, H), lambda b: (0, 0)),        # wo
            pl.BlockSpec((S, QKV_DIM), lambda b: (0, 0)),      # cos table
            pl.BlockSpec((S, QKV_DIM), lambda b: (0, 0)),      # sin_a table
            pl.BlockSpec((S, QKV_DIM), lambda b: (0, 0)),      # sin_b table
        ],
        out_specs=tuple(out_specs),
        compiler_params=pltpu.CompilerParams(
            dimension_semantics=("parallel",)),   # batches shard across v7x's 2 TCs
        cost_estimate=cost,
    )(hidden_states, wqkv, wo, cos_t, sin_a, sin_b)

    packed = results[0]
    if pack > 1:
        out = jnp.concatenate([packed[..., i * H:(i + 1) * H] for i in range(pack)],
                              axis=1)
    else:
        out = packed
    if output_attentions:
        # head-major stacking per kv head -> straight reshape to (B, nH, S, S)
        w = results[1].reshape(B, NUM_HEADS, S, S)
        return out, w
    return out


# ---------------- pure-JAX reference (mirrors the PyTorch code) ----------------
def _rotate_half(x):
    half = x.shape[-1] // 2
    return jnp.concatenate([-x[..., half:], x[..., :half]], axis=-1)


def reference_forward(hidden_states, cos, sin, params):
    B, S, H = hidden_states.shape
    q = (hidden_states @ params["wq"]).reshape(B, S, NUM_HEADS, HEAD_DIM).transpose(0, 2, 1, 3)
    k = (hidden_states @ params["wk"]).reshape(B, S, NUM_KV_HEADS, HEAD_DIM).transpose(0, 2, 1, 3)
    v = (hidden_states @ params["wv"]).reshape(B, S, NUM_KV_HEADS, HEAD_DIM).transpose(0, 2, 1, 3)
    cos_e = cos[None, None]
    sin_e = sin[None, None]
    q = q * cos_e + _rotate_half(q) * sin_e
    k = k * cos_e + _rotate_half(k) * sin_e
    k = jnp.repeat(k, KV_GROUPS, axis=1)      # repeat_kv
    v = jnp.repeat(v, KV_GROUPS, axis=1)
    scores = jnp.einsum("bhqd,bhkd->bhqk", q, k) * ATTN_MULTIPLIER
    r = jnp.arange(S)[:, None]
    c = jnp.arange(S)[None, :]
    scores = scores + jnp.where(c <= r, 0.0, -1e9).astype(jnp.float32)
    w = jax.nn.softmax(scores.astype(jnp.float32), axis=-1)
    o = jnp.einsum("bhqk,bhkd->bhqd", w, v)
    o = o.transpose(0, 2, 1, 3).reshape(B, S, NUM_HEADS * HEAD_DIM)
    return o @ params["wo"], w


# ---------------- main ----------------
if __name__ == "__main__":
    B, S = 2, 8
    key = jax.random.PRNGKey(0)
    k_x, k_q, k_k, k_v, k_o = jax.random.split(key, 5)

    hidden_states = jax.random.normal(k_x, (B, S, HIDDEN), dtype=DTYPE)

    params = {
        "wq": INIT_RANGE * jax.random.normal(k_q, (HIDDEN, Q_DIM), dtype=DTYPE),
        "wk": INIT_RANGE * jax.random.normal(k_k, (HIDDEN, KV_DIM), dtype=DTYPE),
        "wv": INIT_RANGE * jax.random.normal(k_v, (HIDDEN, KV_DIM), dtype=DTYPE),
        "wo": INIT_RANGE * jax.random.normal(k_o, (Q_DIM, HIDDEN), dtype=DTYPE),
    }

    # rotary position embeddings, batch-shared: cos/sin of shape (S, head_dim)
    inv_freq = 1.0 / (ROPE_THETA ** (jnp.arange(0, HEAD_DIM, 2, dtype=jnp.float32) / HEAD_DIM))
    pos = jnp.arange(S, dtype=jnp.float32)
    freqs = jnp.einsum("s,d->sd", pos, inv_freq)
    emb = jnp.concatenate([freqs, freqs], axis=-1)      # (S, D)
    cos = jnp.cos(emb).astype(DTYPE)
    sin = jnp.sin(emb).astype(DTYPE)

    ref_output, ref_weights = reference_forward(hidden_states, cos, sin, params)

    # 1) Strict validation build: f32 MXU operands + attention-weights (debug path).
    debug_fwd = jax.jit(functools.partial(
        granite_attention_forward, compute_dtype=jnp.float32, output_attentions=True))
    out_f32, w_f32 = debug_fwd(hidden_states, cos, sin, params)
    jax.block_until_ready((out_f32, w_f32))
    assert out_f32.shape == (B, S, HIDDEN)
    assert w_f32.shape == (B, NUM_HEADS, S, S)
    assert jnp.allclose(out_f32, ref_output, atol=1e-4, rtol=1e-4)
    assert jnp.allclose(w_f32, ref_weights, atol=1e-4, rtol=1e-4)

    # 2) Production build: bf16 MXU operands, no weights writeback, approx reciprocal.
    prod_fwd = jax.jit(functools.partial(
        granite_attention_forward, compute_dtype=jnp.bfloat16, output_attentions=False))
    out_bf16 = prod_fwd(hidden_states, cos, sin, params)
    jax.block_until_ready(out_bf16)
    assert out_bf16.shape == (B, S, HIDDEN)
    assert jnp.allclose(out_bf16.astype(jnp.float32), ref_output, atol=2e-2, rtol=2e-2)

    print("KERNEL_OK")
</pallas_src>

<mosaic_0001>
module attributes {stable_mosaic.version = 11 : i64} {
  func.func @_granite_attn_kernel(%arg0: i32, %arg1: memref<1x8x64xf32, #tpu.memory_space<vmem>>, %arg2: memref<64x128xf32, #tpu.memory_space<vmem>>, %arg3: memref<64x64xf32, #tpu.memory_space<vmem>>, %arg4: memref<8x128xf32, #tpu.memory_space<vmem>>, %arg5: memref<8x128xf32, #tpu.memory_space<vmem>>, %arg6: memref<8x128xf32, #tpu.memory_space<vmem>>, %arg7: memref<1x4x128xf32, #tpu.memory_space<vmem>>, %arg8: memref<1x2x16x8xf32, #tpu.memory_space<vmem>>) attributes {dimension_semantics = [#tpu.dimension_semantics<parallel>], iteration_bounds = array<i64: 2>, scalar_prefetch = 0 : i64, scratch_operands = 0 : i64, tpu.core_type = #tpu.core_type<tc>, window_params = [{transform_indices = @transform_0, window_bounds = array<i64: 1, 8, 64>}, {pipeline_mode = #tpu.pipeline_mode<synchronous>, transform_indices = @transform_1, window_bounds = array<i64: 64, 128>}, {pipeline_mode = #tpu.pipeline_mode<synchronous>, transform_indices = @transform_2, window_bounds = array<i64: 64, 64>}, {pipeline_mode = #tpu.pipeline_mode<synchronous>, transform_indices = @transform_3, window_bounds = array<i64: 8, 128>}, {pipeline_mode = #tpu.pipeline_mode<synchronous>, transform_indices = @transform_4, window_bounds = array<i64: 8, 128>}, {pipeline_mode = #tpu.pipeline_mode<synchronous>, transform_indices = @transform_5, window_bounds = array<i64: 8, 128>}, {transform_indices = @transform_6, window_bounds = array<i64: 1, 4, 128>}, {transform_indices = @transform_7, window_bounds = array<i64: 1, 2, 16, 8>}]} {
    %c0 = arith.constant 0 : index
    %c0_0 = arith.constant 0 : index
    %c0_1 = arith.constant 0 : index
    %0 = vector.load %arg1[%c0, %c0_0, %c0_1] : memref<1x8x64xf32, #tpu.memory_space<vmem>>, vector<1x8x64xf32>
    %1 = vector.shape_cast %0 : vector<1x8x64xf32> to vector<8x64xf32>
    %c0_2 = arith.constant 0 : index
    %c0_3 = arith.constant 0 : index
    %2 = vector.load %arg2[%c0_2, %c0_3] : memref<64x128xf32, #tpu.memory_space<vmem>>, vector<64x128xf32>
    %cst = arith.constant dense<0.000000e+00> : vector<8x128xf32>
    %3 = tpu.matmul %1, %2, %cst {dimension_numbers = #tpu.dot_dimension_numbers<[1], [0], [0], [1], [0, 0, 1, 1], [], []>} : vector<8x64xf32>, vector<64x128xf32>, vector<8x128xf32> -> vector<8x128xf32>
    %c0_4 = arith.constant 0 : index
    %c0_5 = arith.constant 0 : index
    %4 = vector.load %arg4[%c0_4, %c0_5] : memref<8x128xf32, #tpu.memory_space<vmem>>, vector<8x128xf32>
    %5 = arith.mulf %3, %4 : vector<8x128xf32>
    %c120_i32 = arith.constant 120 : i32
    %6 = tpu.dynamic_rotate %3 by %c120_i32 dim 1 : vector<8x128xf32>, i32 -> vector<8x128xf32>
    %c0_6 = arith.constant 0 : index
    %c0_7 = arith.constant 0 : index
    %7 = vector.load %arg5[%c0_6, %c0_7] : memref<8x128xf32, #tpu.memory_space<vmem>>, vector<8x128xf32>
    %8 = arith.mulf %6, %7 : vector<8x128xf32>
    %9 = arith.addf %5, %8 : vector<8x128xf32>
    %c8_i32 = arith.constant 8 : i32
    %10 = tpu.dynamic_rotate %3 by %c8_i32 dim 1 : vector<8x128xf32>, i32 -> vector<8x128xf32>
    %c0_8 = arith.constant 0 : index
    %c0_9 = arith.constant 0 : index
    %11 = vector.load %arg6[%c0_8, %c0_9] : memref<8x128xf32, #tpu.memory_space<vmem>>, vector<8x128xf32>
    %12 = arith.mulf %10, %11 : vector<8x128xf32>
    %13 = arith.addf %9, %12 : vector<8x128xf32>
    %14 = tpu.iota {dimensions = array<i32: 0>} : vector<8x8xi32>
    %15 = tpu.iota {dimensions = array<i32: 1>} : vector<8x8xi32>
    %16 = arith.cmpi sle, %15, %14 : vector<8x8xi32>
    %cst_10 = arith.constant 0.000000e+00 : f32
    %cst_11 = arith.constant -1.000000e+09 : f32
    %17 = vector.broadcast %cst_10 : f32 to vector<8x8xf32>
    %18 = vector.broadcast %cst_11 : f32 to vector<8x8xf32>
    %19 = arith.select %16, %17, %18 : vector<8x8xi1>, vector<8x8xf32>
    %20 = tpu.concatenate %19, %19 in 0 : vector<8x8xf32>, vector<8x8xf32> -> vector<16x8xf32>
    %cst_12 = arith.constant 0.000000e+00 : f32
    %21 = vector.broadcast %cst_12 : f32 to vector<8x64xf32>
    %22 = vector.extract_strided_slice %13 {offsets = [0, 0], sizes = [8, 16], strides = [1, 1]} : vector<8x128xf32> to vector<8x16xf32>
    %23 = vector.extract_strided_slice %13 {offsets = [0, 16], sizes = [8, 16], strides = [1, 1]} : vector<8x128xf32> to vector<8x16xf32>
    %24 = tpu.concatenate %22, %23 in 0 : vector<8x16xf32>, vector<8x16xf32> -> vector<16x16xf32>
    %25 = vector.extract_strided_slice %13 {offsets = [0, 64], sizes = [8, 16], strides = [1, 1]} : vector<8x128xf32> to vector<8x16xf32>
    %26 = vector.extract_strided_slice %13 {offsets = [0, 96], sizes = [8, 16], strides = [1, 1]} : vector<8x128xf32> to vector<8x16xf32>
    %cst_13 = arith.constant dense<0.000000e+00> : vector<16x8xf32>
    %27 = tpu.matmul %24, %25, %cst_13 {dimension_numbers = #tpu.dot_dimension_numbers<[1], [1], [0], [0], [0, 0, 1, 0], [], []>} : vector<16x16xf32>, vector<8x16xf32>, vector<16x8xf32> -> vector<16x8xf32>
    %28 = arith.addf %27, %20 : vector<16x8xf32>
    %cst_14 = arith.constant dense<0xFF800000> : vector<16xf32>
    %29 = vector.multi_reduction <maximumf>, %28, %cst_14 [1] : vector<16x8xf32> to vector<16xf32>
    %30 = vector.shape_cast %29 : vector<16xf32> to vector<16x1xf32>
    %31 = vector.broadcast %30 : vector<16x1xf32> to vector<16x8xf32>
    %32 = arith.subf %28, %31 : vector<16x8xf32>
    %33 = math.exp %32 : vector<16x8xf32>
    %cst_15 = arith.constant dense<0.000000e+00> : vector<16xf32>
    %34 = vector.multi_reduction <add>, %33, %cst_15 [1] : vector<16x8xf32> to vector<16xf32>
    %35 = vector.shape_cast %34 : vector<16xf32> to vector<16x1xf32>
    %36 = tpu.reciprocal %35 : vector<16x1xf32> -> vector<16x1xf32>
    %37 = vector.broadcast %36 : vector<16x1xf32> to vector<16x8xf32>
    %38 = arith.mulf %33, %37 : vector<16x8xf32>
    %c0_16 = arith.constant 0 : index
    %c0_17 = arith.constant 0 : index
    %c0_18 = arith.constant 0 : index
    %c0_19 = arith.constant 0 : index
    %39 = vector.load %arg8[%c0_16, %c0_17, %c0_18, %c0_19] : memref<1x2x16x8xf32, #tpu.memory_space<vmem>>, vector<1x1x16x8xf32>
    %40 = vector.shape_cast %39 : vector<1x1x16x8xf32> to vector<16x8xf32>
    %41 = vector.shape_cast %38 : vector<16x8xf32> to vector<1x1x16x8xf32>
    tpu.vector_store %arg8[%c0_16, %c0_17, %c0_18, %c0_19], %41 {strides = array<i32>} : memref<1x2x16x8xf32, #tpu.memory_space<vmem>>, vector<1x1x16x8xf32>,
    %cst_20 = arith.constant dense<0.000000e+00> : vector<16x16xf32>
    %42 = tpu.matmul %38, %26, %cst_20 {dimension_numbers = #tpu.dot_dimension_numbers<[1], [0], [0], [1], [0, 0, 1, 1], [], []>} : vector<16x8xf32>, vector<8x16xf32>, vector<16x16xf32> -> vector<16x16xf32>
    %43 = vector.extract_strided_slice %42 {offsets = [0, 0], sizes = [8, 16], strides = [1, 1]} : vector<16x16xf32> to vector<8x16xf32>
    %44 = vector.extract_strided_slice %42 {offsets = [8, 0], sizes = [8, 16], strides = [1, 1]} : vector<16x16xf32> to vector<8x16xf32>
    %45 = tpu.concatenate %43, %44 in 1 : vector<8x16xf32>, vector<8x16xf32> -> vector<8x32xf32>
    %c0_21 = arith.constant 0 : index
    %c0_22 = arith.constant 0 : index
    %46 = vector.load %arg3[%c0_21, %c0_22] : memref<64x64xf32, #tpu.memory_space<vmem>>, vector<32x64xf32>
    %cst_23 = arith.constant dense<0.000000e+00> : vector<8x64xf32>
    %47 = tpu.matmul %45, %46, %cst_23 {dimension_numbers = #tpu.dot_dimension_numbers<[1], [0], [0], [1], [0, 0, 1, 1], [], []>} : vector<8x32xf32>, vector<32x64xf32>, vector<8x64xf32> -> vector<8x64xf32>
    %48 = arith.addf %21, %47 : vector<8x64xf32>
    %49 = vector.extract_strided_slice %13 {offsets = [0, 32], sizes = [8, 16], strides = [1, 1]} : vector<8x128xf32> to vector<8x16xf32>
    %50 = vector.extract_strided_slice %13 {offsets = [0, 48], sizes = [8, 16], strides = [1, 1]} : vector<8x128xf32> to vector<8x16xf32>
    %51 = tpu.concatenate %49, %50 in 0 : vector<8x16xf32>, vector<8x16xf32> -> vector<16x16xf32>
    %52 = vector.extract_strided_slice %13 {offsets = [0, 80], sizes = [8, 16], strides = [1, 1]} : vector<8x128xf32> to vector<8x16xf32>
    %53 = vector.extract_strided_slice %13 {offsets = [0, 112], sizes = [8, 16], strides = [1, 1]} : vector<8x128xf32> to vector<8x16xf32>
    %cst_24 = arith.constant dense<0.000000e+00> : vector<16x8xf32>
    %54 = tpu.matmul %51, %52, %cst_24 {dimension_numbers = #tpu.dot_dimension_numbers<[1], [1], [0], [0], [0, 0, 1, 0], [], []>} : vector<16x16xf32>, vector<8x16xf32>, vector<16x8xf32> -> vector<16x8xf32>
    %55 = arith.addf %54, %20 : vector<16x8xf32>
    %cst_25 = arith.constant dense<0xFF800000> : vector<16xf32>
    %56 = vector.multi_reduction <maximumf>, %55, %cst_25 [1] : vector<16x8xf32> to vector<16xf32>
    %57 = vector.shape_cast %56 : vector<16xf32> to vector<16x1xf32>
    %58 = vector.broadcast %57 : vector<16x1xf32> to vector<16x8xf32>
    %59 = arith.subf %55, %58 : vector<16x8xf32>
    %60 = math.exp %59 : vector<16x8xf32>
    %cst_26 = arith.constant dense<0.000000e+00> : vector<16xf32>
    %61 = vector.multi_reduction <add>, %60, %cst_26 [1] : vector<16x8xf32> to vector<16xf32>
    %62 = vector.shape_cast %61 : vector<16xf32> to vector<16x1xf32>
    %63 = tpu.reciprocal %62 : vector<16x1xf32> -> vector<16x1xf32>
    %64 = vector.broadcast %63 : vector<16x1xf32> to vector<16x8xf32>
    %65 = arith.mulf %60, %64 : vector<16x8xf32>
    %c0_27 = arith.constant 0 : index
    %c1 = arith.constant 1 : index
    %c0_28 = arith.constant 0 : index
    %c0_29 = arith.constant 0 : index
    %66 = vector.load %arg8[%c0_27, %c1, %c0_28, %c0_29] : memref<1x2x16x8xf32, #tpu.memory_space<vmem>>, vector<1x1x16x8xf32>
    %67 = vector.shape_cast %66 : vector<1x1x16x8xf32> to vector<16x8xf32>
    %68 = vector.shape_cast %65 : vector<16x8xf32> to vector<1x1x16x8xf32>
    tpu.vector_store %arg8[%c0_27, %c1, %c0_28, %c0_29], %68 {strides = array<i32>} : memref<1x2x16x8xf32, #tpu.memory_space<vmem>>, vector<1x1x16x8xf32>,
    %cst_30 = arith.constant dense<0.000000e+00> : vector<16x16xf32>
    %69 = tpu.matmul %65, %53, %cst_30 {dimension_numbers = #tpu.dot_dimension_numbers<[1], [0], [0], [1], [0, 0, 1, 1], [], []>} : vector<16x8xf32>, vector<8x16xf32>, vector<16x16xf32> -> vector<16x16xf32>
    %70 = vector.extract_strided_slice %69 {offsets = [0, 0], sizes = [8, 16], strides = [1, 1]} : vector<16x16xf32> to vector<8x16xf32>
    %71 = vector.extract_strided_slice %69 {offsets = [8, 0], sizes = [8, 16], strides = [1, 1]} : vector<16x16xf32> to vector<8x16xf32>
    %72 = tpu.concatenate %70, %71 in 1 : vector<8x16xf32>, vector<8x16xf32> -> vector<8x32xf32>
    %c32 = arith.constant 32 : index
    %c0_31 = arith.constant 0 : index
    %73 = vector.load %arg3[%c32, %c0_31] : memref<64x64xf32, #tpu.memory_space<vmem>>, vector<32x64xf32>
    %cst_32 = arith.constant dense<0.000000e+00> : vector<8x64xf32>
    %74 = tpu.matmul %72, %73, %cst_32 {dimension_numbers = #tpu.dot_dimension_numbers<[1], [0], [0], [1], [0, 0, 1, 1], [], []>} : vector<8x32xf32>, vector<32x64xf32>, vector<8x64xf32> -> vector<8x64xf32>
    %75 = arith.addf %48, %74 : vector<8x64xf32>
    %76 = vector.extract_strided_slice %75 {offsets = [0, 0], sizes = [4, 64], strides = [1, 1]} : vector<8x64xf32> to vector<4x64xf32>
    %77 = vector.extract_strided_slice %75 {offsets = [4, 0], sizes = [4, 64], strides = [1, 1]} : vector<8x64xf32> to vector<4x64xf32>
    %78 = tpu.concatenate %76, %77 in 1 : vector<4x64xf32>, vector<4x64xf32> -> vector<4x128xf32>
    %c0_33 = arith.constant 0 : index
    %c0_34 = arith.constant 0 : index
    %c0_35 = arith.constant 0 : index
    %79 = vector.load %arg7[%c0_33, %c0_34, %c0_35] : memref<1x4x128xf32, #tpu.memory_space<vmem>>, vector<1x4x128xf32>
    %80 = vector.shape_cast %79 : vector<1x4x128xf32> to vector<4x128xf32>
    %81 = vector.shape_cast %78 : vector<4x128xf32> to vector<1x4x128xf32>
    tpu.vector_store %arg7[%c0_33, %c0_34, %c0_35], %81 {strides = array<i32>} : memref<1x4x128xf32, #tpu.memory_space<vmem>>, vector<1x4x128xf32>,
    return
  }
  func.func @transform_0(%arg0: i32) -> (i32, i32, i32) {
    %c0_i32 = arith.constant 0 : i32
    %c0_i32_0 = arith.constant 0 : i32
    %c0_i32_1 = arith.constant 0 : i32
    return %arg0, %c0_i32, %c0_i32_0 : i32, i32, i32
  }
  func.func @transform_1(%arg0: i32) -> (i32, i32) {
    %c0_i32 = arith.constant 0 : i32
    %c0_i32_0 = arith.constant 0 : i32
    %c0_i32_1 = arith.constant 0 : i32
    return %c0_i32, %c0_i32_0 : i32, i32
  }
  func.func @transform_2(%arg0: i32) -> (i32, i32) {
    %c0_i32 = arith.constant 0 : i32
    %c0_i32_0 = arith.constant 0 : i32
    %c0_i32_1 = arith.constant 0 : i32
    return %c0_i32, %c0_i32_0 : i32, i32
  }
  func.func @transform_3(%arg0: i32) -> (i32, i32) {
    %c0_i32 = arith.constant 0 : i32
    %c0_i32_0 = arith.constant 0 : i32
    %c0_i32_1 = arith.constant 0 : i32
    return %c0_i32, %c0_i32_0 : i32, i32
  }
  func.func @transform_4(%arg0: i32) -> (i32, i32) {
    %c0_i32 = arith.constant 0 : i32
    %c0_i32_0 = arith.constant 0 : i32
    %c0_i32_1 = arith.constant 0 : i32
    return %c0_i32, %c0_i32_0 : i32, i32
  }
  func.func @transform_5(%arg0: i32) -> (i32, i32) {
    %c0_i32 = arith.constant 0 : i32
    %c0_i32_0 = arith.constant 0 : i32
    %c0_i32_1 = arith.constant 0 : i32
    return %c0_i32, %c0_i32_0 : i32, i32
  }
  func.func @transform_6(%arg0: i32) -> (i32, i32, i32) {
    %c0_i32 = arith.constant 0 : i32
    %c0_i32_0 = arith.constant 0 : i32
    %c0_i32_1 = arith.constant 0 : i32
    return %arg0, %c0_i32, %c0_i32_0 : i32, i32, i32
  }
  func.func @transform_7(%arg0: i32) -> (i32, i32, i32, i32) {
    %c0_i32 = arith.constant 0 : i32
    %c0_i32_0 = arith.constant 0 : i32
    %c0_i32_1 = arith.constant 0 : i32
    %c0_i32_2 = arith.constant 0 : i32
    return %arg0, %c0_i32, %c0_i32_0, %c0_i32_1 : i32, i32, i32, i32
  }
}

</mosaic_0001>

<llo_original>
// kernel: tile.59
$region0: #{tile.59}
  %s0 = inlined_call_operand.vmem [shape: f32[8,2,16], index: 0, kind: input, shape index: {}]
  %s1 = inlined_call_operand.vmem [shape: f32[8,32], index: 1, kind: output, shape index: {}]
  $region1: #{tile.59} parent=0
    #allocation0 [shape = 'u8[32768]{0}', space=vmem, size = 0x8000, scoped, tag = 'scoped mem for input reshape']
    %s3 = sshll.u32 1, 2
    %s4 = ssub.s32 %s3, 1
    %s5 = smul.addr 2, 7
    %s6 = scalar_lea.vmem %s0, %s5
    %v7 = vld [vmem:[%s6] sm:%s4]
    %s8 = scalar_lea.vmem [#allocation0], 56
    %9 = vst [vmem:[%s8] sm:%s4] %v7
    %s10 = smul.addr 2, 6
    %s11 = scalar_lea.vmem %s0, %s10
    %v12 = vld [vmem:[%s11] sm:%s4]
    %s13 = scalar_lea.vmem [#allocation0], 48
    %14 = vst [vmem:[%s13] sm:%s4] %v12
    %s15 = smul.addr 2, 5
    %s16 = scalar_lea.vmem %s0, %s15
    %v17 = vld [vmem:[%s16] sm:%s4]
    %s18 = scalar_lea.vmem [#allocation0], 40
    %19 = vst [vmem:[%s18] sm:%s4] %v17
    %s20 = smul.addr 2, 4
    %s21 = scalar_lea.vmem %s0, %s20
    %v22 = vld [vmem:[%s21] sm:%s4]
    %s23 = scalar_lea.vmem [#allocation0], 32
    %24 = vst [vmem:[%s23] sm:%s4] %v22
    %s25 = smul.addr 2, 3
    %s26 = scalar_lea.vmem %s0, %s25
    %v27 = vld [vmem:[%s26] sm:%s4]
    %s28 = scalar_lea.vmem [#allocation0], 24
    %29 = vst [vmem:[%s28] sm:%s4] %v27
    %s30 = smul.addr 2, 2
    %s31 = scalar_lea.vmem %s0, %s30
    %v32 = vld [vmem:[%s31] sm:%s4]
    %s33 = scalar_lea.vmem [#allocation0], 16
    %34 = vst [vmem:[%s33] sm:%s4] %v32
    %s35 = scalar_lea.vmem %s0, 2
    %v36 = vld [vmem:[%s35] sm:%s4]
    %s37 = scalar_lea.vmem [#allocation0], 8
    %38 = vst [vmem:[%s37] sm:%s4] %v36
    %v39 = vld [vmem:[%s0] sm:%s4]
    %40 = vst [vmem:[#allocation0] sm:%s4] %v39
    %v41 = vld [vmem:[#allocation0] ss:$8 sm:$0xf]
    %v42 = vld [vmem:[#allocation0] ss:$8 sm:$0xf0]
    %vm43 = vcmask 1047556
    %v44 = vsel %vm43, %v42, %v41
    %vm45 = vcmask 130048
    %46 = vst.msk [vmem:[%s1] sm:$0xff] %vm45, %v44
    %s47 = scalar_lea.vmem [#allocation0], 1
    %v48 = vld [vmem:[%s47] ss:$8 sm:$0xf]
    %s49 = scalar_lea.vmem [#allocation0], 1
    %v50 = vld [vmem:[%s49] ss:$8 sm:$0xf0]
    %vm51 = vcmask 1047556
    %v52 = vsel %vm51, %v50, %v48
    %53 = vrot.lane.b32.xlu0 %v52, 16
    %v54 = vpop.permute.xlu0 %53
    %vm55 = vcmask 261248
    %56 = vst.msk [vmem:[%s1] sm:$0xff] %vm55, %v54

// kernel: tile.54
$region0: #{tile.54}
  %s0 = inlined_call_operand.vmem [shape: f32[8,4,16], index: 0, kind: input, shape index: {}]
  %s1 = inlined_call_operand.vmem [shape: f32[8,64], index: 1, kind: output, shape index: {}]
  $region1: #{tile.54} parent=0
    #allocation0 [shape = 'u8[32768]{0}', space=vmem, size = 0x8000, scoped, tag = 'scoped mem for input reshape']
    %s3 = sshll.u32 1, 4
    %s4 = ssub.s32 %s3, 1
    %s5 = smul.addr 4, 7
    %s6 = scalar_lea.vmem %s0, %s5
    %v7 = vld [vmem:[%s6] sm:%s4]
    %s8 = scalar_lea.vmem [#allocation0], 56
    %9 = vst [vmem:[%s8] sm:%s4] %v7
    %s10 = smul.addr 4, 6
    %s11 = scalar_lea.vmem %s0, %s10
    %v12 = vld [vmem:[%s11] sm:%s4]
    %s13 = scalar_lea.vmem [#allocation0], 48
    %14 = vst [vmem:[%s13] sm:%s4] %v12
    %s15 = smul.addr 4, 5
    %s16 = scalar_lea.vmem %s0, %s15
    %v17 = vld [vmem:[%s16] sm:%s4]
    %s18 = scalar_lea.vmem [#allocation0], 40
    %19 = vst [vmem:[%s18] sm:%s4] %v17
    %s20 = smul.addr 4, 4
    %s21 = scalar_lea.vmem %s0, %s20
    %v22 = vld [vmem:[%s21] sm:%s4]
    %s23 = scalar_lea.vmem [#allocation0], 32
    %24 = vst [vmem:[%s23] sm:%s4] %v22
    %s25 = smul.addr 4, 3
    %s26 = scalar_lea.vmem %s0, %s25
    %v27 = vld [vmem:[%s26] sm:%s4]
    %s28 = scalar_lea.vmem [#allocation0], 24
    %29 = vst [vmem:[%s28] sm:%s4] %v27
    %s30 = smul.addr 4, 2
    %s31 = scalar_lea.vmem %s0, %s30
    %v32 = vld [vmem:[%s31] sm:%s4]
    %s33 = scalar_lea.vmem [#allocation0], 16
    %34 = vst [vmem:[%s33] sm:%s4] %v32
    %s35 = scalar_lea.vmem %s0, 4
    %v36 = vld [vmem:[%s35] sm:%s4]
    %s37 = scalar_lea.vmem [#allocation0], 8
    %38 = vst [vmem:[%s37] sm:%s4] %v36
    %v39 = vld [vmem:[%s0] sm:%s4]
    %40 = vst [vmem:[#allocation0] sm:%s4] %v39
    %v41 = vld [vmem:[#allocation0] ss:$8 sm:$0xf]
    %v42 = vld [vmem:[#allocation0] ss:$8 sm:$0xf0]
    %vm43 = vcmask 1047556
    %v44 = vsel %vm43, %v42, %v41
    %vm45 = vcmask 130048
    %46 = vst.msk [vmem:[%s1] sm:$0xff] %vm45, %v44
    %s47 = scalar_lea.vmem [#allocation0], 3
    %v48 = vld [vmem:[%s47] ss:$8 sm:$0xf]
    %s49 = scalar_lea.vmem [#allocation0], 3
    %v50 = vld [vmem:[%s49] ss:$8 sm:$0xf0]
    %vm51 = vcmask 1047556
    %v52 = vsel %vm51, %v50, %v48
    %53 = vrot.lane.b32.xlu0 %v52, 48
    %v54 = vpop.permute.xlu0 %53
    %vm55 = vcmask 523648
    %56 = vst.msk [vmem:[%s1] sm:$0xff] %vm55, %v54
    %s57 = scalar_lea.vmem [#allocation0], 2
    %v58 = vld [vmem:[%s57] ss:$8 sm:$0xf]
    %s59 = scalar_lea.vmem [#allocation0], 2
    %v60 = vld [vmem:[%s59] ss:$8 sm:$0xf0]
    %vm61 = vcmask 1047556
    %v62 = vsel %vm61, %v60, %v58
    %63 = vrot.lane.b32.xlu0 %v62, 32
    %v64 = vpop.permute.xlu0 %63
    %vm65 = vcmask 392448
    %66 = vst.msk [vmem:[%s1] sm:$0xff] %vm65, %v64
    %s67 = scalar_lea.vmem [#allocation0], 1
    %v68 = vld [vmem:[%s67] ss:$8 sm:$0xf]
    %s69 = scalar_lea.vmem [#allocation0], 1
    %v70 = vld [vmem:[%s69] ss:$8 sm:$0xf0]
    %vm71 = vcmask 1047556
    %v72 = vsel %vm71, %v70, %v68
    %73 = vrot.lane.b32.xlu0 %v72, 16
    %v74 = vpop.permute.xlu0 %73
    %vm75 = vcmask 261248
    %76 = vst.msk [vmem:[%s1] sm:$0xff] %vm75, %v74

// kernel: granite_attention_forward.1
$region0: #{granite_attention_forward.1}
  #allocation0 [shape = 'u32[]', space=smem, size = 0x4, offset = 0x4, fixed_abs, tag = 'smem constant byte address 0x4 - core index']
  #allocation1 [shape = 'u32[144,128]{1,0:T(1,128)}', space=vmem, size = 0x12000, scoped, tag = 'internal scratch']
  %s0 = inlined_call_operand.vmem [shape: f32[2,8,64], index: 0, kind: input, shape index: {}]
  %s1 = inlined_call_operand.vmem [shape: f32[64,128], index: 1, kind: input, shape index: {}]
  %s2 = inlined_call_operand.vmem [shape: f32[64,64], index: 2, kind: input, shape index: {}]
  %s3 = inlined_call_operand.vmem [shape: f32[8,128], index: 3, kind: input, shape index: {}]
  %s4 = inlined_call_operand.vmem [shape: f32[8,128], index: 4, kind: input, shape index: {}]
  %s5 = inlined_call_operand.vmem [shape: f32[8,128], index: 5, kind: input, shape index: {}]
  %s6 = inlined_call_operand.vmem [shape: f32[2,4,128], index: 6, kind: output, shape index: {0}]
  %s7 = inlined_call_operand.hbm [shape: f32[2,2,16,8], index: 7, kind: output, shape index: {1}]
  %8 = xla_tuple %s6, %s7
  %s9 = sld [smem:[#allocation0]]
  $region65: #{granite_attention_forward.1} parent=0
    _
  %s11 = ssub.s32 1, %s9
  %s12 = scalar_select 0, %s11, %s9
  $region1: #{granite_attention_forward.1} parent=0
    #allocation2 [shape = 'u8[32768]{0}', space=vmem, size = 0x8000, scoped, tag = 'output window, operand 1']
    #allocation3 [shape = 's32[2]{0}', space=sflag, size = 0x8, scoped, tag = 'scoped memory for granite_attention_forward.1']
    %13 = vsyncpa [#allocation3], 0
    %s14 = scalar_lea.sflag [#allocation3], 1
    %15 = vsyncpa %s14, 0
    loop: start=0, step=1, limit=4
    $region2: #{granite_attention_forward.1} parent=1 // loop_pre_header
      _
    $region3: #{granite_attention_forward.1} parent=1 // loop_header
      %s17 = sphi 0, %s21
      %p18 = scmp.ge.s32.totalorder %s17, 4
      %s27 = sphi 0, %s29
      %s30 = sphi 0, %s27
      %s31 = sphi 0, %s30
      %s47 = sphi 0, %s31
      %s51 = sphi 0, %s51
      %s53 = sphi 0, %s51
      %s54 = sphi 0, %s53
      %s68 = sphi 0, %s54
      %s72 = sphi 0, %s72
      %s74 = sphi 0, %s72
      %s75 = sphi 0, %s74
      %s89 = sphi 0, %s75
      %s93 = sphi 0, %s93
      %s95 = sphi 0, %s93
      %s96 = sphi 0, %s95
      %s110 = sphi 0, %s96
      %s114 = sphi 0, %s114
      %s116 = sphi 0, %s114
      %s117 = sphi 0, %s116
      %s131 = sphi 0, %s117
      %s135 = sphi 0, %s135
      %s137 = sphi 0, %s135
      %s138 = sphi 0, %s137
      %s152 = sphi 0, %s138
      %s158 = sphi 0, %s160
      %s161 = sphi 0, %s158
      %s162 = sphi 0, %s161
      %s178 = sphi 0, %s162
      %s184 = sphi 0, %s186
      %s187 = sphi 0, %s184
      %s188 = sphi 0, %s187
      %s204 = sphi 0, %s188
    $region4: #{granite_attention_forward.1} parent=1 // loop_header_branch
      %20 = sbr.rel (%p18) target = $region8
    $region5: #{granite_attention_forward.1} parent=1 // loop_body
      %s22 = ssub.s32 %s17, 1
      %s23 = ssub.s32 %s17, 2
      %s24 = sadd.s32 %s17, 1
      %s25 = ssub.s32 %s17, %s24
      %p26 = scmp.eq.s32.totalorder %s25, 0
      %s28 = sadd.s32 %s27, 1
      %s29 = scalar_select %p26, %s27, %s28
      %p32 = pneg %p26
      %p33 = scmp.eq.s32.totalorder %s17, 1
      %p34 = por %p32, %p33
      %p35 = scmp.ne.s32.totalorder %s27, %s30
      %p36 = scmp.eq.s32.totalorder %s17, 0
      %p37 = por %p35, %p36
      %p38 = scmp.ne.s32.totalorder %s27, %s30
      %p39 = scmp.eq.s32.totalorder %s22, 1
      %p40 = por %p38, %p39
      %p41 = scmp.ne.s32.totalorder %s30, %s31
      %p42 = scmp.eq.s32.totalorder %s22, 0
      %p43 = por %p41, %p42
      %p44 = scmp.ne.s32.totalorder %s30, %s31
      %p45 = scmp.eq.s32.totalorder %s23, 1
      %p46 = por %p44, %p45
      %p48 = scmp.ne.s32.totalorder %s31, %s47
      %p49 = scmp.eq.s32.totalorder %s23, 0
      %p50 = por %p48, %p49
      %s52 = sadd.s32 %s51, 1
      %p55 = scmp.eq.s32.totalorder %s17, 1
      %p56 = scmp.ne.s32.totalorder %s51, %s53
      %p57 = scmp.eq.s32.totalorder %s17, 0
      %p58 = por %p56, %p57
      %p59 = scmp.ne.s32.totalorder %s51, %s53
      %p60 = scmp.eq.s32.totalorder %s22, 1
      %p61 = por %p59, %p60
      %p62 = scmp.ne.s32.totalorder %s53, %s54
      %p63 = scmp.eq.s32.totalorder %s22, 0
      %p64 = por %p62, %p63
      %p65 = scmp.ne.s32.totalorder %s53, %s54
      %p66 = scmp.eq.s32.totalorder %s23, 1
      %p67 = por %p65, %p66
      %p69 = scmp.ne.s32.totalorder %s54, %s68
      %p70 = scmp.eq.s32.totalorder %s23, 0
      %p71 = por %p69, %p70
      %s73 = sadd.s32 %s72, 1
      %p76 = scmp.eq.s32.totalorder %s17, 1
      %p77 = scmp.ne.s32.totalorder %s72, %s74
      %p78 = scmp.eq.s32.totalorder %s17, 0
      %p79 = por %p77, %p78
      %p80 = scmp.ne.s32.totalorder %s72, %s74
      %p81 = scmp.eq.s32.totalorder %s22, 1
      %p82 = por %p80, %p81
      %p83 = scmp.ne.s32.totalorder %s74, %s75
      %p84 = scmp.eq.s32.totalorder %s22, 0
      %p85 = por %p83, %p84
      %p86 = scmp.ne.s32.totalorder %s74, %s75
      %p87 = scmp.eq.s32.totalorder %s23, 1
      %p88 = por %p86, %p87
      %p90 = scmp.ne.s32.totalorder %s75, %s89
      %p91 = scmp.eq.s32.totalorder %s23, 0
      %p92 = por %p90, %p91
      %s94 = sadd.s32 %s93, 1
      %p97 = scmp.eq.s32.totalorder %s17, 1
      %p98 = scmp.ne.s32.totalorder %s93, %s95
      %p99 = scmp.eq.s32.totalorder %s17, 0
      %p100 = por %p98, %p99
      %p101 = scmp.ne.s32.totalorder %s93, %s95
      %p102 = scmp.eq.s32.totalorder %s22, 1
      %p103 = por %p101, %p102
      %p104 = scmp.ne.s32.totalorder %s95, %s96
      %p105 = scmp.eq.s32.totalorder %s22, 0
      %p106 = por %p104, %p105
      %p107 = scmp.ne.s32.totalorder %s95, %s96
      %p108 = scmp.eq.s32.totalorder %s23, 1
      %p109 = por %p107, %p108
      %p111 = scmp.ne.s32.totalorder %s96, %s110
      %p112 = scmp.eq.s32.totalorder %s23, 0
      %p113 = por %p111, %p112
      %s115 = sadd.s32 %s114, 1
      %p118 = scmp.eq.s32.totalorder %s17, 1
      %p119 = scmp.ne.s32.totalorder %s114, %s116
      %p120 = scmp.eq.s32.totalorder %s17, 0
      %p121 = por %p119, %p120
      %p122 = scmp.ne.s32.totalorder %s114, %s116
      %p123 = scmp.eq.s32.totalorder %s22, 1
      %p124 = por %p122, %p123
      %p125 = scmp.ne.s32.totalorder %s116, %s117
      %p126 = scmp.eq.s32.totalorder %s22, 0
      %p127 = por %p125, %p126
      %p128 = scmp.ne.s32.totalorder %s116, %s117
      %p129 = scmp.eq.s32.totalorder %s23, 1
      %p130 = por %p128, %p129
      %p132 = scmp.ne.s32.totalorder %s117, %s131
      %p133 = scmp.eq.s32.totalorder %s23, 0
      %p134 = por %p132, %p133
      %s136 = sadd.s32 %s135, 1
      %p139 = scmp.eq.s32.totalorder %s17, 1
      %p140 = scmp.ne.s32.totalorder %s135, %s137
      %p141 = scmp.eq.s32.totalorder %s17, 0
      %p142 = por %p140, %p141
      %p143 = scmp.ne.s32.totalorder %s135, %s137
      %p144 = scmp.eq.s32.totalorder %s22, 1
      %p145 = por %p143, %p144
      %p146 = scmp.ne.s32.totalorder %s137, %s138
      %p147 = scmp.eq.s32.totalorder %s22, 0
      %p148 = por %p146, %p147
      %p149 = scmp.ne.s32.totalorder %s137, %s138
      %p150 = scmp.eq.s32.totalorder %s23, 1
      %p151 = por %p149, %p150
      %p153 = scmp.ne.s32.totalorder %s138, %s152
      %p154 = scmp.eq.s32.totalorder %s23, 0
      %p155 = por %p153, %p154
      %s156 = ssub.s32 %s17, %s24
      %p157 = scmp.eq.s32.totalorder %s156, 0
      %s159 = sadd.s32 %s158, 1
      %s160 = scalar_select %p157, %s158, %s159
      %p163 = pneg %p157
      %p164 = scmp.eq.s32.totalorder %s17, 1
      %p165 = por %p163, %p164
      %p166 = scmp.ne.s32.totalorder %s158, %s161
      %p167 = scmp.eq.s32.totalorder %s17, 0
      %p168 = por %p166, %p167
      %p169 = scmp.ne.s32.totalorder %s158, %s161
      %p170 = scmp.eq.s32.totalorder %s22, 1
      %p171 = por %p169, %p170
      %p172 = scmp.ne.s32.totalorder %s161, %s162
      %p173 = scmp.eq.s32.totalorder %s22, 0
      %p174 = por %p172, %p173
      %p175 = scmp.ne.s32.totalorder %s161, %s162
      %p176 = scmp.eq.s32.totalorder %s23, 1
      %p177 = por %p175, %p176
      %p179 = scmp.ne.s32.totalorder %s162, %s178
      %p180 = scmp.eq.s32.totalorder %s23, 0
      %p181 = por %p179, %p180
      %s182 = ssub.s32 %s17, %s24
      %p183 = scmp.eq.s32.totalorder %s182, 0
      %s185 = sadd.s32 %s184, 1
      %s186 = scalar_select %p183, %s184, %s185
      %p189 = pneg %p183
      %p190 = scmp.eq.s32.totalorder %s17, 1
      %p191 = por %p189, %p190
      %p192 = scmp.ne.s32.totalorder %s184, %s187
      %p193 = scmp.eq.s32.totalorder %s17, 0
      %p194 = por %p192, %p193
      %p195 = scmp.ne.s32.totalorder %s184, %s187
      %p196 = scmp.eq.s32.totalorder %s22, 1
      %p197 = por %p195, %p196
      %p198 = scmp.ne.s32.totalorder %s187, %s188
      %p199 = scmp.eq.s32.totalorder %s22, 0
      %p200 = por %p198, %p199
      %p201 = scmp.ne.s32.totalorder %s187, %s188
      %p202 = scmp.eq.s32.totalorder %s23, 1
      %p203 = por %p201, %p202
      %p205 = scmp.ne.s32.totalorder %s188, %s204
      %p206 = scmp.eq.s32.totalorder %s23, 0
      %p207 = por %p205, %p206
      %p208 = scmp.le.s32.totalorder 1, %s17
      %p209 = scmp.lt.s32.totalorder %s17, 3
      %p210 = pnand %p208, %p209
      %p211 = pneg %p210
      // Predicated region
      $region9: #{granite_attention_forward.1} parent=5 // pred_check
        _
      $region10: #{granite_attention_forward.1} parent=5 // pred_check_branch
        %213 = sbr.rel (%p210) target = $region12
      $region11: #{granite_attention_forward.1} parent=5 // pred_region
        %s214 = ssub.s32 %s17, 1
        // Predicated region
        $region13: #{granite_attention_forward.1} parent=11 // pred_check
          %p215 = pneg %p64
        $region14: #{granite_attention_forward.1} parent=11 // pred_check_branch
          %217 = sbr.rel (%p215) target = $region16
        $region15: #{granite_attention_forward.1} parent=11 // pred_region
          _
        $region16: #{granite_attention_forward.1} parent=11 // pred_fallthru
          _
        // Predicated region
        $region17: #{granite_attention_forward.1} parent=11 // pred_check
          %p218 = pneg %p85
        $region18: #{granite_attention_forward.1} parent=11 // pred_check_branch
          %220 = sbr.rel (%p218) target = $region20
        $region19: #{granite_attention_forward.1} parent=11 // pred_region
          _
        $region20: #{granite_attention_forward.1} parent=11 // pred_fallthru
          _
        // Predicated region
        $region21: #{granite_attention_forward.1} parent=11 // pred_check
          %p221 = pneg %p106
        $region22: #{granite_attention_forward.1} parent=11 // pred_check_branch
          %223 = sbr.rel (%p221) target = $region24
        $region23: #{granite_attention_forward.1} parent=11 // pred_region
          _
        $region24: #{granite_attention_forward.1} parent=11 // pred_fallthru
          _
        // Predicated region
        $region25: #{granite_attention_forward.1} parent=11 // pred_check
          %p224 = pneg %p127
        $region26: #{granite_attention_forward.1} parent=11 // pred_check_branch
          %226 = sbr.rel (%p224) target = $region28
        $region27: #{granite_attention_forward.1} parent=11 // pred_region
          _
        $region28: #{granite_attention_forward.1} parent=11 // pred_fallthru
          _
        // Predicated region
        $region29: #{granite_attention_forward.1} parent=11 // pred_check
          %p227 = pneg %p148
        $region30: #{granite_attention_forward.1} parent=11 // pred_check_branch
          %229 = sbr.rel (%p227) target = $region32
        $region31: #{granite_attention_forward.1} parent=11 // pred_region
          _
        $region32: #{granite_attention_forward.1} parent=11 // pred_fallthru
          _
      $region12: #{granite_attention_forward.1} parent=5 // pred_fallthru
        _
      %p230 = scmp.lt.s32.totalorder %s17, 2
      // Predicated region
      $region33: #{granite_attention_forward.1} parent=5 // pred_check
        %p231 = pneg %p230
      $region34: #{granite_attention_forward.1} parent=5 // pred_check_branch
        %233 = sbr.rel (%p231) target = $region36
      $region35: #{granite_attention_forward.1} parent=5 // pred_region
        // Predicated region
        $region37: #{granite_attention_forward.1} parent=35 // pred_check
          %p234 = pneg %p37
        $region38: #{granite_attention_forward.1} parent=35 // pred_check_branch
          %236 = sbr.rel (%p234) target = $region40
        $region39: #{granite_attention_forward.1} parent=35 // pred_region
          %p237 = scmp.lt.s32.totalorder %s17, 1
          %s238 = scalar_select %p237, %s17, 1
          %s239 = smul.addr %s238, 8
          %s240 = scalar_lea.vmem %s0, %s239
        $region40: #{granite_attention_forward.1} parent=35 // pred_fallthru
          _
      $region36: #{granite_attention_forward.1} parent=5 // pred_fallthru
        _
      %p241 = scmp.le.s32.totalorder 1, %s17
      %p242 = scmp.lt.s32.totalorder %s17, 3
      %p243 = pnand %p241, %p242
      %p244 = pneg %p243
      // Predicated region
      $region41: #{granite_attention_forward.1} parent=5 // pred_check
        _
      $region42: #{granite_attention_forward.1} parent=5 // pred_check_branch
        %246 = sbr.rel (%p243) target = $region44
      $region43: #{granite_attention_forward.1} parent=5 // pred_region
        %s247 = ssub.s32 %s17, 1
        %p248 = scmp.lt.s32.totalorder %s22, 1
        %s249 = scalar_select %p248, %s22, 1
        %s250 = smul.addr %s249, 8
        %s251 = scalar_lea.vmem %s0, %s250
        %p252 = pneg %p43
        %p253 = pneg %p40
        %p254 = pneg %p64
        %p255 = pneg %p61
        %p256 = pneg %p85
        %p257 = pneg %p82
        %p258 = pneg %p106
        %p259 = pneg %p103
        %p260 = pneg %p127
        %p261 = pneg %p124
        %p262 = pneg %p148
        %p263 = pneg %p145
        %p264 = pneg %p174
        %p265 = pneg %p171
        %p266 = scmp.lt.s32.totalorder %s22, 1
        %s267 = scalar_select %p266, %s22, 1
        %s268 = smul.addr %s267, 4
        %s269 = scalar_lea.vmem %s6, %s268
        %p270 = pneg %p200
        %p271 = pneg %p197
        %s272 = sand.u32 %s187, 1
        %s273 = scalar_lea.sflag [#allocation3], %s272
        %s274 = sand.u32 %s187, 1
        %s275 = smul.addr %s274, 32
        %s276 = scalar_lea.vmem [#allocation2], %s275
        %p277 = scmp.lt.s32.totalorder %s22, 1
        %s278 = scalar_select %p277, %s22, 1
        %s279 = smul.addr %s278, 8
        %s280 = scalar_lea.vmem %s0, %s279
        %p281 = scmp.lt.s32.totalorder %s22, 1
        %s282 = scalar_select %p281, %s22, 1
        %s283 = smul.addr %s282, 4
        %s284 = scalar_lea.vmem %s6, %s283
        %v285 = vld [vmem:[%s280] sm:$0xff]
        %v286 = vld [vmem:[%s1] sm:$0xff]
        %v287 = vld [vmem:[%s1 + $0x8] sm:$0xff]
        %v288 = vld [vmem:[%s1 + $0x10] sm:$0xff]
        %v289 = vld [vmem:[%s1 + $0x18] sm:$0xff]
        %v290 = vld [vmem:[%s1 + $0x20] sm:$0xff]
        %v291 = vld [vmem:[%s1 + $0x28] sm:$0xff]
        %v292 = vld [vmem:[%s1 + $0x30] sm:$0xff]
        %v293 = vld [vmem:[%s1 + $0x38] sm:$0xff]
        %vm294 = vcmask 523264
        %v296 = vsel %vm294, %v285, 0
        %298 = vmatprep.subr.mxu0 0.0
        %299 = vmatpush1.msra.mxu0 0.0
        %300 = vmatprep.subr.mxu0 0.0
        %301 = vmatpush1.msra.mxu0 0.0
        %302 = vmatprep.subr.mxu0 0.0
        %303 = vmatpush1.msra.mxu0 0.0
        %304 = vmatprep.subr.mxu0 0.0
        %305 = vmatpush1.msra.mxu0 0.0
        %306 = vmatprep.subr.mxu0 0.0
        %307 = vmatpush1.msra.mxu0 0.0
        %308 = vmatprep.subr.mxu0 0.0
        %309 = vmatpush1.msra.mxu0 0.0
        %310 = vmatprep.subr.mxu0 0.0
        %311 = vmatpush1.msra.mxu0 0.0
        %312 = vmatprep.subr.mxu0 0.0
        %313 = vmatpush1.msra.mxu0 0.0
        %314 = vmatprep.subr.mxu0 0.0
        %315 = vmatpush1.msra.mxu0 %v293
        %316 = vmatprep.subr.mxu0 0.0
        %317 = vmatpush1.msra.mxu0 %v292
        %318 = vmatprep.subr.mxu0 0.0
        %319 = vmatpush1.msra.mxu0 %v291
        %320 = vmatprep.subr.mxu0 0.0
        %321 = vmatpush1.msra.mxu0 %v290
        %322 = vmatprep.subr.mxu0 0.0
        %323 = vmatpush1.msra.mxu0 %v289
        %324 = vmatprep.subr.mxu0 0.0
        %325 = vmatpush1.msra.mxu0 %v288
        %326 = vmatprep.subr.mxu0 0.0
        %327 = vmatpush1.msra.mxu0 %v287
        %328 = vmatprep.subr.mxu0 0.0
        %329 = vmatpush1.msra.mxu0 %v286
        %330 = vmatprep.subr.mxu0 0.0
        %331 = vmatpush2.msra.mxu0 0.0
        %332 = vmatprep.subr.mxu0 0.0
        %333 = vmatpush2.msra.mxu0 0.0
        %334 = vmatprep.subr.mxu0 0.0
        %335 = vmatpush2.msra.mxu0 0.0
        %336 = vmatprep.subr.mxu0 0.0
        %337 = vmatpush2.msra.mxu0 0.0
        %338 = vmatprep.subr.mxu0 0.0
        %339 = vmatpush2.msra.mxu0 0.0
        %340 = vmatprep.subr.mxu0 0.0
        %341 = vmatpush2.msra.mxu0 0.0
        %342 = vmatprep.subr.mxu0 0.0
        %343 = vmatpush2.msra.mxu0 0.0
        %344 = vmatprep.subr.mxu0 0.0
        %345 = vmatpush2.msra.mxu0 0.0
        %346 = vmatprep.subr.mxu0 0.0
        %347 = vmatpush2.msra.mxu0 0.0
        %348 = vmatprep.subr.mxu0 0.0
        %349 = vmatpush2.msra.mxu0 0.0
        %350 = vmatprep.subr.mxu0 0.0
        %351 = vmatpush2.msra.mxu0 0.0
        %352 = vmatprep.subr.mxu0 0.0
        %353 = vmatpush2.msra.mxu0 0.0
        %354 = vmatprep.subr.mxu0 0.0
        %355 = vmatpush2.msra.mxu0 0.0
        %356 = vmatprep.subr.mxu0 0.0
        %357 = vmatpush2.msra.mxu0 0.0
        %358 = vmatprep.subr.mxu0 0.0
        %359 = vmatpush2.msra.mxu0 0.0
        %360 = vmatprep.subr.mxu0 0.0
        %361 = vmatpush2.msra.mxu0 0.0
        %362 = vmatprep.mubr.f32.mxu0 0.0
        %363 = vmatmul.mubr.f32.gmra.mxu0 %v296
        %v364 = vpop.f32.mrf.mxu0
        %v365 = vadd.f32 0.0, %v364
        %v366 = vpop.f32.mrf.mxu0
        %367 = vdwg.mxu0
        %v368 = vld [vmem:[%s3] sm:$0xff]
        %v369 = vmul.f32 %v365, %v368
        %370 = vrot.lane.b32.xlu0 %v365, 120
        %v371 = vpop.permute.xlu0 %370
        %v372 = vld [vmem:[%s4] sm:$0xff]
        %v373 = vmul.f32 %v371, %v372
        %v374 = vadd.f32 %v369, %v373
        %375 = vrot.lane.b32.xlu0 %v365, 8
        %v376 = vpop.permute.xlu0 %375
        %v377 = vld [vmem:[%s5] sm:$0xff]
        %v378 = vmul.f32 %v376, %v377
        %v379 = vadd.f32 %v374, %v378
        %v380 = vlaneseq
        %v381 = vshrl.u32 %v380, 7
        %v382 = vlaneseq
        %v383 = vand.u32 %v382, 127
        %vm384 = vcmp.le.s32.totalorder %v383, %v381
        %v385 = vsel %vm384, 0.0, -1e+09
        %387 = vrot.lane.b32.xlu0 %v379, 112
        %v388 = vpop.permute.xlu0 %387
        %389 = vrot.lane.b32.xlu0 %v379, 64
        %v390 = vpop.permute.xlu0 %389
        %vm391 = vcmask 130048
        %v392 = vsel %vm391, %v379, 0
        %v394 = vsel %vm391, %v388, 0
        %v396 = vsel %vm391, %v390, 0
        %398 = vmatprep.subr.mxu0 0.0
        %399 = vmatpush1.xpose.msra.mxu0 0.0
        %400 = vmatprep.subr.mxu0 0.0
        %401 = vmatpush1.xpose.msra.mxu0 0.0
        %402 = vmatprep.subr.mxu0 0.0
        %403 = vmatpush1.xpose.msra.mxu0 0.0
        %404 = vmatprep.subr.mxu0 0.0
        %405 = vmatpush1.xpose.msra.mxu0 0.0
        %406 = vmatprep.subr.mxu0 0.0
        %407 = vmatpush1.xpose.msra.mxu0 0.0
        %408 = vmatprep.subr.mxu0 0.0
        %409 = vmatpush1.xpose.msra.mxu0 0.0
        %410 = vmatprep.subr.mxu0 0.0
        %411 = vmatpush1.xpose.msra.mxu0 0.0
        %412 = vmatprep.subr.mxu0 0.0
        %413 = vmatpush1.xpose.msra.mxu0 0.0
        %414 = vmatprep.subr.mxu0 0.0
        %415 = vmatpush1.xpose.msra.mxu0 0.0
        %416 = vmatprep.subr.mxu0 0.0
        %417 = vmatpush1.xpose.msra.mxu0 0.0
        %418 = vmatprep.subr.mxu0 0.0
        %419 = vmatpush1.xpose.msra.mxu0 0.0
        %420 = vmatprep.subr.mxu0 0.0
        %421 = vmatpush1.xpose.msra.mxu0 0.0
        %422 = vmatprep.subr.mxu0 0.0
        %423 = vmatpush1.xpose.msra.mxu0 0.0
        %424 = vmatprep.subr.mxu0 0.0
        %425 = vmatpush1.xpose.msra.mxu0 0.0
        %426 = vmatprep.subr.mxu0 0.0
        %427 = vmatpush1.xpose.msra.mxu0 0.0
        %428 = vmatprep.subr.mxu0 0.0
        %429 = vmatpush1.xpose.msra.mxu0 %v396
        %430 = vmatprep.subr.mxu0 0.0
        %431 = vmatpush2.xpose.msra.mxu0 0.0
        %432 = vmatprep.subr.mxu0 0.0
        %433 = vmatpush2.xpose.msra.mxu0 0.0
        %434 = vmatprep.subr.mxu0 0.0
        %435 = vmatpush2.xpose.msra.mxu0 0.0
        %436 = vmatprep.subr.mxu0 0.0
        %437 = vmatpush2.xpose.msra.mxu0 0.0
        %438 = vmatprep.subr.mxu0 0.0
        %439 = vmatpush2.xpose.msra.mxu0 0.0
        %440 = vmatprep.subr.mxu0 0.0
        %441 = vmatpush2.xpose.msra.mxu0 0.0
        %442 = vmatprep.subr.mxu0 0.0
        %443 = vmatpush2.xpose.msra.mxu0 0.0
        %444 = vmatprep.subr.mxu0 0.0
        %445 = vmatpush2.xpose.msra.mxu0 0.0
        %446 = vmatprep.subr.mxu0 0.0
        %447 = vmatpush2.xpose.msra.mxu0 0.0
        %448 = vmatprep.subr.mxu0 0.0
        %449 = vmatpush2.xpose.msra.mxu0 0.0
        %450 = vmatprep.subr.mxu0 0.0
        %451 = vmatpush2.xpose.msra.mxu0 0.0
        %452 = vmatprep.subr.mxu0 0.0
        %453 = vmatpush2.xpose.msra.mxu0 0.0
        %454 = vmatprep.subr.mxu0 0.0
        %455 = vmatpush2.xpose.msra.mxu0 0.0
        %456 = vmatprep.subr.mxu0 0.0
        %457 = vmatpush2.xpose.msra.mxu0 0.0
        %458 = vmatprep.subr.mxu0 0.0
        %459 = vmatpush2.xpose.msra.mxu0 0.0
        %460 = vmatprep.subr.mxu0 0.0
        %461 = vmatpush2.xpose.msra.mxu0 0.0
        %462 = vmatprep.mubr.f32.mxu0 0.0
        %463 = vmatmul.mubr.f32.gmra.mxu0 %v392
        %v464 = vpop.f32.mrf.mxu0
        %v465 = vadd.f32 %v385, %v464
        %v466 = vpop.f32.mrf.mxu0
        %467 = vmatprep.mubr.f32.mxu0 0.0
        %468 = vmatmul.mubr.f32.gmra.mxu0 %v394
        %v469 = vpop.f32.mrf.mxu0
        %v470 = vadd.f32 %v385, %v469
        %v471 = vpop.f32.mrf.mxu0
        %472 = vdwg.mxu0
        %vm473 = vcmask 64512
        %v474 = vsel %vm473, %v465, -inf
        %475 = vmax.xlane.f32.xlu0 %v474
        %v476 = vpop.xlane.xlu0 %475
        %v477 = vsel %vm473, %v470, -inf
        %478 = vmax.xlane.f32.xlu0 %v477
        %v479 = vpop.xlane.xlu0 %478
        %v480 = vsub.f32 %v465, %v476
        %v481 = vsub.f32 %v470, %v479
        %v482 = vmul.f32 %v480, 1.442695
        %v483 = vpow.pop %v482
        %v484 = vmul.f32 %v481, 1.442695
        %v485 = vpow.pop %v484
        %v486 = vsel %vm473, %v483, 0.0
        %487 = vadd.xlane.f32.xlu0 %v486
        %v488 = vpop.xlane.xlu0 %487
        %v489 = vsel %vm473, %v485, 0.0
        %490 = vadd.xlane.f32.xlu0 %v489
        %v491 = vpop.xlane.xlu0 %490
        %v492 = vrcp.pop %v488
        %v493 = vrcp.pop %v491
        %v494 = vmul.f32 %v483, %v492
        %v495 = vmul.f32 %v485, %v493
        %496 = vst.msk [vmem:[%s276] sm:$0xff] %vm473, %v494
        %497 = vst.msk [vmem:[%s276 + $0x8] sm:$0xff] %vm473, %v495
        %498 = vrot.lane.b32.xlu0 %v379, 32
        %v499 = vpop.permute.xlu0 %498
        %v502 = vsel %vm473, %v494, 0
        %v505 = vsel %vm473, %v495, 0
        %507 = vmatprep.subr.mxu0 0.0
        %508 = vmatpush1.msra.mxu0 0.0
        %509 = vmatprep.subr.mxu0 0.0
        %510 = vmatpush1.msra.mxu0 0.0
        %511 = vmatprep.subr.mxu0 0.0
        %512 = vmatpush1.msra.mxu0 0.0
        %513 = vmatprep.subr.mxu0 0.0
        %514 = vmatpush1.msra.mxu0 0.0
        %515 = vmatprep.subr.mxu0 0.0
        %516 = vmatpush1.msra.mxu0 0.0
        %517 = vmatprep.subr.mxu0 0.0
        %518 = vmatpush1.msra.mxu0 0.0
        %519 = vmatprep.subr.mxu0 0.0
        %520 = vmatpush1.msra.mxu0 0.0
        %521 = vmatprep.subr.mxu0 0.0
        %522 = vmatpush1.msra.mxu0 0.0
        %523 = vmatprep.subr.mxu0 0.0
        %524 = vmatpush1.msra.mxu0 0.0
        %525 = vmatprep.subr.mxu0 0.0
        %526 = vmatpush1.msra.mxu0 0.0
        %527 = vmatprep.subr.mxu0 0.0
        %528 = vmatpush1.msra.mxu0 0.0
        %529 = vmatprep.subr.mxu0 0.0
        %530 = vmatpush1.msra.mxu0 0.0
        %531 = vmatprep.subr.mxu0 0.0
        %532 = vmatpush1.msra.mxu0 0.0
        %533 = vmatprep.subr.mxu0 0.0
        %534 = vmatpush1.msra.mxu0 0.0
        %535 = vmatprep.subr.mxu0 0.0
        %536 = vmatpush1.msra.mxu0 0.0
        %537 = vmatprep.subr.mxu0 0.0
        %538 = vmatpush1.msra.mxu0 %v499
        %539 = vmatprep.subr.mxu0 0.0
        %540 = vmatpush2.msra.mxu0 0.0
        %541 = vmatprep.subr.mxu0 0.0
        %542 = vmatpush2.msra.mxu0 0.0
        %543 = vmatprep.subr.mxu0 0.0
        %544 = vmatpush2.msra.mxu0 0.0
        %545 = vmatprep.subr.mxu0 0.0
        %546 = vmatpush2.msra.mxu0 0.0
        %547 = vmatprep.subr.mxu0 0.0
        %548 = vmatpush2.msra.mxu0 0.0
        %549 = vmatprep.subr.mxu0 0.0
        %550 = vmatpush2.msra.mxu0 0.0
        %551 = vmatprep.subr.mxu0 0.0
        %552 = vmatpush2.msra.mxu0 0.0
        %553 = vmatprep.subr.mxu0 0.0
        %554 = vmatpush2.msra.mxu0 0.0
        %555 = vmatprep.subr.mxu0 0.0
        %556 = vmatpush2.msra.mxu0 0.0
        %557 = vmatprep.subr.mxu0 0.0
        %558 = vmatpush2.msra.mxu0 0.0
        %559 = vmatprep.subr.mxu0 0.0
        %560 = vmatpush2.msra.mxu0 0.0
        %561 = vmatprep.subr.mxu0 0.0
        %562 = vmatpush2.msra.mxu0 0.0
        %563 = vmatprep.subr.mxu0 0.0
        %564 = vmatpush2.msra.mxu0 0.0
        %565 = vmatprep.subr.mxu0 0.0
        %566 = vmatpush2.msra.mxu0 0.0
        %567 = vmatprep.subr.mxu0 0.0
        %568 = vmatpush2.msra.mxu0 0.0
        %569 = vmatprep.subr.mxu0 0.0
        %570 = vmatpush2.msra.mxu0 0.0
        %571 = vmatprep.mubr.f32.mxu0 0.0
        %572 = vmatmul.mubr.f32.gmra.mxu0 %v502
        %v573 = vpop.f32.mrf.mxu0
        %v574 = vadd.f32 0.0, %v573
        %v575 = vpop.f32.mrf.mxu0
        %576 = vmatprep.mubr.f32.mxu0 0.0
        %577 = vmatmul.mubr.f32.gmra.mxu0 %v505
        %v578 = vpop.f32.mrf.mxu0
        %v579 = vadd.f32 0.0, %v578
        %v580 = vpop.f32.mrf.mxu0
        %581 = vdwg.mxu0
        %583 = vrot.lane.b32.xlu0 %v579, 16
        %v584 = vpop.permute.xlu0 %583
        %v586 = vsel %vm391, %v574, %v584
        %v587 = vld [vmem:[%s2] sm:$0xff]
        %v588 = vld [vmem:[%s2 + $0x8] sm:$0xff]
        %v589 = vld [vmem:[%s2 + $0x10] sm:$0xff]
        %v590 = vld [vmem:[%s2 + $0x18] sm:$0xff]
        %591 = vrot.lane.b32.xlu0 %v379, 96
        %v592 = vpop.permute.xlu0 %591
        %593 = vrot.lane.b32.xlu0 %v388, 96
        %v594 = vpop.permute.xlu0 %593
        %595 = vrot.lane.b32.xlu0 %v379, 48
        %v596 = vpop.permute.xlu0 %595
        %v597 = vsel %vm391, %v592, 0
        %v599 = vsel %vm391, %v594, 0
        %v601 = vsel %vm391, %v596, 0
        %603 = vmatprep.subr.mxu0 0.0
        %604 = vmatpush1.xpose.msra.mxu0 0.0
        %605 = vmatprep.subr.mxu0 0.0
        %606 = vmatpush1.xpose.msra.mxu0 0.0
        %607 = vmatprep.subr.mxu0 0.0
        %608 = vmatpush1.xpose.msra.mxu0 0.0
        %609 = vmatprep.subr.mxu0 0.0
        %610 = vmatpush1.xpose.msra.mxu0 0.0
        %611 = vmatprep.subr.mxu0 0.0
        %612 = vmatpush1.xpose.msra.mxu0 0.0
        %613 = vmatprep.subr.mxu0 0.0
        %614 = vmatpush1.xpose.msra.mxu0 0.0
        %615 = vmatprep.subr.mxu0 0.0
        %616 = vmatpush1.xpose.msra.mxu0 0.0
        %617 = vmatprep.subr.mxu0 0.0
        %618 = vmatpush1.xpose.msra.mxu0 0.0
        %619 = vmatprep.subr.mxu0 0.0
        %620 = vmatpush1.xpose.msra.mxu0 0.0
        %621 = vmatprep.subr.mxu0 0.0
        %622 = vmatpush1.xpose.msra.mxu0 0.0
        %623 = vmatprep.subr.mxu0 0.0
        %624 = vmatpush1.xpose.msra.mxu0 0.0
        %625 = vmatprep.subr.mxu0 0.0
        %626 = vmatpush1.xpose.msra.mxu0 0.0
        %627 = vmatprep.subr.mxu0 0.0
        %628 = vmatpush1.xpose.msra.mxu0 0.0
        %629 = vmatprep.subr.mxu0 0.0
        %630 = vmatpush1.xpose.msra.mxu0 0.0
        %631 = vmatprep.subr.mxu0 0.0
        %632 = vmatpush1.xpose.msra.mxu0 0.0
        %633 = vmatprep.subr.mxu0 0.0
        %634 = vmatpush1.xpose.msra.mxu0 %v601
        %635 = vmatprep.subr.mxu0 0.0
        %636 = vmatpush2.xpose.msra.mxu0 0.0
        %637 = vmatprep.subr.mxu0 0.0
        %638 = vmatpush2.xpose.msra.mxu0 0.0
        %639 = vmatprep.subr.mxu0 0.0
        %640 = vmatpush2.xpose.msra.mxu0 0.0
        %641 = vmatprep.subr.mxu0 0.0
        %642 = vmatpush2.xpose.msra.mxu0 0.0
        %643 = vmatprep.subr.mxu0 0.0
        %644 = vmatpush2.xpose.msra.mxu0 0.0
        %645 = vmatprep.subr.mxu0 0.0
        %646 = vmatpush2.xpose.msra.mxu0 0.0
        %647 = vmatprep.subr.mxu0 0.0
        %648 = vmatpush2.xpose.msra.mxu0 0.0
        %649 = vmatprep.subr.mxu0 0.0
        %650 = vmatpush2.xpose.msra.mxu0 0.0
        %651 = vmatprep.subr.mxu0 0.0
        %652 = vmatpush2.xpose.msra.mxu0 0.0
        %653 = vmatprep.subr.mxu0 0.0
        %654 = vmatpush2.xpose.msra.mxu0 0.0
        %655 = vmatprep.subr.mxu0 0.0
        %656 = vmatpush2.xpose.msra.mxu0 0.0
        %657 = vmatprep.subr.mxu0 0.0
        %658 = vmatpush2.xpose.msra.mxu0 0.0
        %659 = vmatprep.subr.mxu0 0.0
        %660 = vmatpush2.xpose.msra.mxu0 0.0
        %661 = vmatprep.subr.mxu0 0.0
        %662 = vmatpush2.xpose.msra.mxu0 0.0
        %663 = vmatprep.subr.mxu0 0.0
        %664 = vmatpush2.xpose.msra.mxu0 0.0
        %665 = vmatprep.subr.mxu0 0.0
        %666 = vmatpush2.xpose.msra.mxu0 0.0
        %667 = vmatprep.mubr.f32.mxu0 0.0
        %668 = vmatmul.mubr.f32.gmra.mxu0 %v597
        %v669 = vpop.f32.mrf.mxu0
        %v670 = vadd.f32 %v385, %v669
        %v671 = vpop.f32.mrf.mxu0
        %672 = vmatprep.mubr.f32.mxu0 0.0
        %673 = vmatmul.mubr.f32.gmra.mxu0 %v599
        %v674 = vpop.f32.mrf.mxu0
        %v675 = vadd.f32 %v385, %v674
        %v676 = vpop.f32.mrf.mxu0
        %677 = vdwg.mxu0
        %v678 = vsel %vm473, %v670, -inf
        %679 = vmax.xlane.f32.xlu0 %v678
        %v680 = vpop.xlane.xlu0 %679
        %v681 = vsel %vm473, %v675, -inf
        %682 = vmax.xlane.f32.xlu0 %v681
        %v683 = vpop.xlane.xlu0 %682
        %v684 = vsub.f32 %v670, %v680
        %v685 = vsub.f32 %v675, %v683
        %v686 = vmul.f32 %v684, 1.442695
        %v687 = vpow.pop %v686
        %v688 = vmul.f32 %v685, 1.442695
        %v689 = vpow.pop %v688
        %v690 = vsel %vm473, %v687, 0.0
        %691 = vadd.xlane.f32.xlu0 %v690
        %v692 = vpop.xlane.xlu0 %691
        %v693 = vsel %vm473, %v689, 0.0
        %694 = vadd.xlane.f32.xlu0 %v693
        %v695 = vpop.xlane.xlu0 %694
        %v696 = vrcp.pop %v692
        %v697 = vrcp.pop %v695
        %v698 = vmul.f32 %v687, %v696
        %v699 = vmul.f32 %v689, %v697
        %s700 = scalar_lea.vmem %s276, 16 [#allocation2]
        %701 = vst.msk [vmem:[%s700] sm:$0xff] %vm473, %v698
        %702 = vst.msk [vmem:[%s700 + $0x8] sm:$0xff] %vm473, %v699
        %703 = vrot.lane.b32.xlu0 %v379, 16
        %v704 = vpop.permute.xlu0 %703
        %v707 = vsel %vm473, %v698, 0
        %v710 = vsel %vm473, %v699, 0
        %712 = vmatprep.subr.mxu0 0.0
        %713 = vmatpush1.msra.mxu0 0.0
        %714 = vmatprep.subr.mxu0 0.0
        %715 = vmatpush1.msra.mxu0 0.0
        %716 = vmatprep.subr.mxu0 0.0
        %717 = vmatpush1.msra.mxu0 0.0
        %718 = vmatprep.subr.mxu0 0.0
        %719 = vmatpush1.msra.mxu0 0.0
        %720 = vmatprep.subr.mxu0 0.0
        %721 = vmatpush1.msra.mxu0 0.0
        %722 = vmatprep.subr.mxu0 0.0
        %723 = vmatpush1.msra.mxu0 0.0
        %724 = vmatprep.subr.mxu0 0.0
        %725 = vmatpush1.msra.mxu0 0.0
        %726 = vmatprep.subr.mxu0 0.0
        %727 = vmatpush1.msra.mxu0 0.0
        %728 = vmatprep.subr.mxu0 0.0
        %729 = vmatpush1.msra.mxu0 0.0
        %730 = vmatprep.subr.mxu0 0.0
        %731 = vmatpush1.msra.mxu0 0.0
        %732 = vmatprep.subr.mxu0 0.0
        %733 = vmatpush1.msra.mxu0 0.0
        %734 = vmatprep.subr.mxu0 0.0
        %735 = vmatpush1.msra.mxu0 0.0
        %736 = vmatprep.subr.mxu0 0.0
        %737 = vmatpush1.msra.mxu0 0.0
        %738 = vmatprep.subr.mxu0 0.0
        %739 = vmatpush1.msra.mxu0 0.0
        %740 = vmatprep.subr.mxu0 0.0
        %741 = vmatpush1.msra.mxu0 0.0
        %742 = vmatprep.subr.mxu0 0.0
        %743 = vmatpush1.msra.mxu0 %v704
        %744 = vmatprep.subr.mxu0 0.0
        %745 = vmatpush2.msra.mxu0 0.0
        %746 = vmatprep.subr.mxu0 0.0
        %747 = vmatpush2.msra.mxu0 0.0
        %748 = vmatprep.subr.mxu0 0.0
        %749 = vmatpush2.msra.mxu0 0.0
        %750 = vmatprep.subr.mxu0 0.0
        %751 = vmatpush2.msra.mxu0 0.0
        %752 = vmatprep.subr.mxu0 0.0
        %753 = vmatpush2.msra.mxu0 0.0
        %754 = vmatprep.subr.mxu0 0.0
        %755 = vmatpush2.msra.mxu0 0.0
        %756 = vmatprep.subr.mxu0 0.0
        %757 = vmatpush2.msra.mxu0 0.0
        %758 = vmatprep.subr.mxu0 0.0
        %759 = vmatpush2.msra.mxu0 0.0
        %760 = vmatprep.subr.mxu0 0.0
        %761 = vmatpush2.msra.mxu0 0.0
        %762 = vmatprep.subr.mxu0 0.0
        %763 = vmatpush2.msra.mxu0 0.0
        %764 = vmatprep.subr.mxu0 0.0
        %765 = vmatpush2.msra.mxu0 0.0
        %766 = vmatprep.subr.mxu0 0.0
        %767 = vmatpush2.msra.mxu0 0.0
        %768 = vmatprep.subr.mxu0 0.0
        %769 = vmatpush2.msra.mxu0 0.0
        %770 = vmatprep.subr.mxu0 0.0
        %771 = vmatpush2.msra.mxu0 0.0
        %772 = vmatprep.subr.mxu0 0.0
        %773 = vmatpush2.msra.mxu0 0.0
        %774 = vmatprep.subr.mxu0 0.0
        %775 = vmatpush2.msra.mxu0 0.0
        %776 = vmatprep.mubr.f32.mxu0 0.0
        %777 = vmatmul.mubr.f32.gmra.mxu0 %v707
        %v778 = vpop.f32.mrf.mxu0
        %v779 = vadd.f32 0.0, %v778
        %v780 = vpop.f32.mrf.mxu0
        %781 = vmatprep.mubr.f32.mxu0 0.0
        %782 = vmatmul.mubr.f32.gmra.mxu0 %v710
        %v783 = vpop.f32.mrf.mxu0
        %v784 = vadd.f32 0.0, %v783
        %v785 = vpop.f32.mrf.mxu0
        %786 = vdwg.mxu0
        %788 = vrot.lane.b32.xlu0 %v784, 16
        %v789 = vpop.permute.xlu0 %788
        %v791 = vsel %vm391, %v779, %v789
        %v792 = vld [vmem:[%s2 + $0x20] sm:$0xff]
        %v793 = vld [vmem:[%s2 + $0x28] sm:$0xff]
        %v794 = vld [vmem:[%s2 + $0x30] sm:$0xff]
        %v795 = vld [vmem:[%s2 + $0x38] sm:$0xff]
        %vm796 = vcmask 261120
        %v798 = vsel %vm796, %v791, 0
        %800 = vmatprep.subr.mxu0 0.0
        %801 = vmatpush1.msra.mxu0 0.0
        %802 = vmatprep.subr.mxu0 0.0
        %803 = vmatpush1.msra.mxu0 0.0
        %804 = vmatprep.subr.mxu0 0.0
        %805 = vmatpush1.msra.mxu0 0.0
        %806 = vmatprep.subr.mxu0 0.0
        %807 = vmatpush1.msra.mxu0 0.0
        %808 = vmatprep.subr.mxu0 0.0
        %809 = vmatpush1.msra.mxu0 0.0
        %810 = vmatprep.subr.mxu0 0.0
        %811 = vmatpush1.msra.mxu0 0.0
        %812 = vmatprep.subr.mxu0 0.0
        %813 = vmatpush1.msra.mxu0 0.0
        %814 = vmatprep.subr.mxu0 0.0
        %815 = vmatpush1.msra.mxu0 0.0
        %816 = vmatprep.subr.mxu0 0.0
        %817 = vmatpush1.msra.mxu0 0.0
        %818 = vmatprep.subr.mxu0 0.0
        %819 = vmatpush1.msra.mxu0 0.0
        %820 = vmatprep.subr.mxu0 0.0
        %821 = vmatpush1.msra.mxu0 0.0
        %822 = vmatprep.subr.mxu0 0.0
        %823 = vmatpush1.msra.mxu0 0.0
        %824 = vmatprep.subr.mxu0 0.0
        %825 = vmatpush1.msra.mxu0 %v795
        %826 = vmatprep.subr.mxu0 0.0
        %827 = vmatpush1.msra.mxu0 %v794
        %828 = vmatprep.subr.mxu0 0.0
        %829 = vmatpush1.msra.mxu0 %v793
        %830 = vmatprep.subr.mxu0 0.0
        %831 = vmatpush1.msra.mxu0 %v792
        %832 = vmatprep.subr.mxu0 0.0
        %833 = vmatpush2.msra.mxu0 0.0
        %834 = vmatprep.subr.mxu0 0.0
        %835 = vmatpush2.msra.mxu0 0.0
        %836 = vmatprep.subr.mxu0 0.0
        %837 = vmatpush2.msra.mxu0 0.0
        %838 = vmatprep.subr.mxu0 0.0
        %839 = vmatpush2.msra.mxu0 0.0
        %840 = vmatprep.subr.mxu0 0.0
        %841 = vmatpush2.msra.mxu0 0.0
        %842 = vmatprep.subr.mxu0 0.0
        %843 = vmatpush2.msra.mxu0 0.0
        %844 = vmatprep.subr.mxu0 0.0
        %845 = vmatpush2.msra.mxu0 0.0
        %846 = vmatprep.subr.mxu0 0.0
        %847 = vmatpush2.msra.mxu0 0.0
        %848 = vmatprep.subr.mxu0 0.0
        %849 = vmatpush2.msra.mxu0 0.0
        %850 = vmatprep.subr.mxu0 0.0
        %851 = vmatpush2.msra.mxu0 0.0
        %852 = vmatprep.subr.mxu0 0.0
        %853 = vmatpush2.msra.mxu0 0.0
        %854 = vmatprep.subr.mxu0 0.0
        %855 = vmatpush2.msra.mxu0 0.0
        %856 = vmatprep.subr.mxu0 0.0
        %857 = vmatpush2.msra.mxu0 0.0
        %858 = vmatprep.subr.mxu0 0.0
        %859 = vmatpush2.msra.mxu0 0.0
        %860 = vmatprep.subr.mxu0 0.0
        %861 = vmatpush2.msra.mxu0 0.0
        %862 = vmatprep.subr.mxu0 0.0
        %863 = vmatpush2.msra.mxu0 0.0
        %864 = vmatprep.mubr.f32.mxu0 0.0
        %865 = vmatmul.mubr.f32.gmra.mxu0 %v798
        %v866 = vpop.f32.mrf.mxu0
        %v867 = vadd.f32 0.0, %v866
        %v868 = vpop.f32.mrf.mxu0
        %869 = vdwg.mxu0
        %v871 = vsel %vm796, %v586, 0
        %873 = vmatprep.subr.mxu0 0.0
        %874 = vmatpush1.msra.mxu0 0.0
        %875 = vmatprep.subr.mxu0 0.0
        %876 = vmatpush1.msra.mxu0 0.0
        %877 = vmatprep.subr.mxu0 0.0
        %878 = vmatpush1.msra.mxu0 0.0
        %879 = vmatprep.subr.mxu0 0.0
        %880 = vmatpush1.msra.mxu0 0.0
        %881 = vmatprep.subr.mxu0 0.0
        %882 = vmatpush1.msra.mxu0 0.0
        %883 = vmatprep.subr.mxu0 0.0
        %884 = vmatpush1.msra.mxu0 0.0
        %885 = vmatprep.subr.mxu0 0.0
        %886 = vmatpush1.msra.mxu0 0.0
        %887 = vmatprep.subr.mxu0 0.0
        %888 = vmatpush1.msra.mxu0 0.0
        %889 = vmatprep.subr.mxu0 0.0
        %890 = vmatpush1.msra.mxu0 0.0
        %891 = vmatprep.subr.mxu0 0.0
        %892 = vmatpush1.msra.mxu0 0.0
        %893 = vmatprep.subr.mxu0 0.0
        %894 = vmatpush1.msra.mxu0 0.0
        %895 = vmatprep.subr.mxu0 0.0
        %896 = vmatpush1.msra.mxu0 0.0
        %897 = vmatprep.subr.mxu0 0.0
        %898 = vmatpush1.msra.mxu0 %v590
        %899 = vmatprep.subr.mxu0 0.0
        %900 = vmatpush1.msra.mxu0 %v589
        %901 = vmatprep.subr.mxu0 0.0
        %902 = vmatpush1.msra.mxu0 %v588
        %903 = vmatprep.subr.mxu0 0.0
        %904 = vmatpush1.msra.mxu0 %v587
        %905 = vmatprep.subr.mxu0 0.0
        %906 = vmatpush2.msra.mxu0 0.0
        %907 = vmatprep.subr.mxu0 0.0
        %908 = vmatpush2.msra.mxu0 0.0
        %909 = vmatprep.subr.mxu0 0.0
        %910 = vmatpush2.msra.mxu0 0.0
        %911 = vmatprep.subr.mxu0 0.0
        %912 = vmatpush2.msra.mxu0 0.0
        %913 = vmatprep.subr.mxu0 0.0
        %914 = vmatpush2.msra.mxu0 0.0
        %915 = vmatprep.subr.mxu0 0.0
        %916 = vmatpush2.msra.mxu0 0.0
        %917 = vmatprep.subr.mxu0 0.0
        %918 = vmatpush2.msra.mxu0 0.0
        %919 = vmatprep.subr.mxu0 0.0
        %920 = vmatpush2.msra.mxu0 0.0
        %921 = vmatprep.subr.mxu0 0.0
        %922 = vmatpush2.msra.mxu0 0.0
        %923 = vmatprep.subr.mxu0 0.0
        %924 = vmatpush2.msra.mxu0 0.0
        %925 = vmatprep.subr.mxu0 0.0
        %926 = vmatpush2.msra.mxu0 0.0
        %927 = vmatprep.subr.mxu0 0.0
        %928 = vmatpush2.msra.mxu0 0.0
        %929 = vmatprep.subr.mxu0 0.0
        %930 = vmatpush2.msra.mxu0 0.0
        %931 = vmatprep.subr.mxu0 0.0
        %932 = vmatpush2.msra.mxu0 0.0
        %933 = vmatprep.subr.mxu0 0.0
        %934 = vmatpush2.msra.mxu0 0.0
        %935 = vmatprep.subr.mxu0 0.0
        %936 = vmatpush2.msra.mxu0 0.0
        %937 = vmatprep.mubr.f32.mxu0 0.0
        %938 = vmatmul.mubr.f32.gmra.mxu0 %v871
        %v939 = vpop.f32.mrf.mxu0
        %v940 = vadd.f32 %v867, %v939
        %v941 = vpop.f32.mrf.mxu0
        %942 = vdwg.mxu0
        %v944 = vrot.slane %v940, 4
        %945 = vrot.lane.b32.xlu0 %v944, 64
        %v946 = vpop.permute.xlu0 %945
        %v948 = vsel %vm294, %v940, %v946
        %949 = vst [vmem:[%s284] sm:$0xf] %v948
        %p950 = scmp.lt.s32.totalorder %s22, 1
        %s951 = scalar_select %p950, %s22, 1
        %s952 = smul.addr %s951, 4
        %s953 = scalar_lea.vmem %s6, %s952
        %s954 = sand.u32 %s187, 1
        %s955 = scalar_lea.sflag [#allocation3], %s954
        %s956 = sand.u32 %s187, 1
        %s957 = smul.addr %s956, 32
        %s958 = scalar_lea.vmem [#allocation2], %s957
        // Predicated region
        $region45: #{granite_attention_forward.1} parent=43 // pred_check
          %p959 = pneg %p171
        $region46: #{granite_attention_forward.1} parent=43 // pred_check_branch
          %961 = sbr.rel (%p959) target = $region48
        $region47: #{granite_attention_forward.1} parent=43 // pred_region
          _
        $region48: #{granite_attention_forward.1} parent=43 // pred_fallthru
          _
        // Predicated region
        $region49: #{granite_attention_forward.1} parent=43 // pred_check
          %p962 = pneg %p197
        $region50: #{granite_attention_forward.1} parent=43 // pred_check_branch
          %964 = sbr.rel (%p962) target = $region52
        $region51: #{granite_attention_forward.1} parent=43 // pred_region
          %s966 = ssub.s32 512, 512
          %967 = vsyncadd %s955, %s966
          %s968 = smul.addr %s22, 4
          %s969 = smul.addr %s968, 128
          %s970 = scalar_lea.hbm %s7, %s969
          %s971 = sshll.u32 %s958, 4
          %s972 = int_to_ptr.vmem [resolvable:$true] %s971
          %977 = dma.vmem_to_hbm [thread:$0]  %s972, 512, %s970, %s955, 128, 128, 8
        $region52: #{granite_attention_forward.1} parent=43 // pred_fallthru
          _
      $region44: #{granite_attention_forward.1} parent=5 // pred_fallthru
        _
      %p978 = scmp.le.s32.totalorder 2, %s17
      // Predicated region
      $region53: #{granite_attention_forward.1} parent=5 // pred_check
        %p979 = pneg %p978
      $region54: #{granite_attention_forward.1} parent=5 // pred_check_branch
        %981 = sbr.rel (%p979) target = $region56
      $region55: #{granite_attention_forward.1} parent=5 // pred_region
        %s982 = ssub.s32 %s17, 2
        // Predicated region
        $region57: #{granite_attention_forward.1} parent=55 // pred_check
          %p983 = pneg %p177
        $region58: #{granite_attention_forward.1} parent=55 // pred_check_branch
          %985 = sbr.rel (%p983) target = $region60
        $region59: #{granite_attention_forward.1} parent=55 // pred_region
          %p986 = scmp.lt.s32.totalorder %s23, 1
          %s987 = scalar_select %p986, %s23, 1
          %s988 = smul.addr %s987, 4
          %s989 = scalar_lea.vmem %s6, %s988
        $region60: #{granite_attention_forward.1} parent=55 // pred_fallthru
          _
        // Predicated region
        $region61: #{granite_attention_forward.1} parent=55 // pred_check
          %p990 = pneg %p203
        $region62: #{granite_attention_forward.1} parent=55 // pred_check_branch
          %992 = sbr.rel (%p990) target = $region64
        $region63: #{granite_attention_forward.1} parent=55 // pred_region
          %s993 = sand.u32 %s188, 1
          %s994 = scalar_lea.sflag [#allocation3], %s993
          %s995 = sand.u32 %s188, 1
          %s996 = smul.addr %s995, 32
          %s997 = scalar_lea.vmem [#allocation2], %s996
          %998 = dma.done %s994, 512
        $region64: #{granite_attention_forward.1} parent=55 // pred_fallthru
          _
      $region56: #{granite_attention_forward.1} parent=5 // pred_fallthru
        _
    $region6: #{granite_attention_forward.1} parent=1 // loop_footer
      %s21 = sadd.s32 1, %s17
    $region7: #{granite_attention_forward.1} parent=1 // loop_footer_branch
      %16 = sbr.rel target = $region3
    $region8: #{granite_attention_forward.1} parent=1 // loop_exit
      _
    %999 = vsyncpa [#allocation3], 1
    %s1000 = scalar_lea.sflag [#allocation3], 1
    %1001 = vsyncpa %s1000, 1

</llo_original>
